<compile_context>
chip_gen: v5e
topology: v5e:2x2
jax: 0.10.0
libtpu: 0.0.40
codegen_flags: <defaults>
</compile_context>

<pallas_src>
import jax
import jax.numpy as jnp
from jax.experimental import pallas as pl
from jax.experimental.pallas import tpu as pltpu

HIDDEN_SIZE = 64
INPUT_SIZE = 4
NUM_LAYERS = 2          # implemented explicitly as two stacked cells
OUTPUT_SIZE = 1
OUTPUT_WINDOW = 6

H = HIDDEN_SIZE         # 64 real hidden units per layer
G = 4 * H               # 256 packed gate columns: [i | f | g | o], 64 lanes each
HP = 2 * H              # 128-lane state container: state kept duplicated as [h | h]
OUT_PAD = 128           # lane-padded FC output width (avoids masked partial stores)
MAX_BT = 128            # max batch tile (fills MXU rows); larger batches split the grid


def _lstm_kernel(gx_ref,     # (T, Bt, G)   precomputed layer-0 gate pre-acts (+ bias)
                 whh0_ref,   # (HP, G)      layer-0 recurrent weights, rows [W_hh0^T; 0]
                 w1_ref,     # (HP, G)      layer-1 fused weights, rows [W_ih1^T; W_hh1^T]
                 b1_ref,     # (1, G)       layer-1 bias (b_ih + b_hh)
                 wfc_ref,    # (HP, OUT_PAD)
                 bfc_ref,    # (1, OUT_PAD)
                 out_ref,    # (Bt, OUT_PAD)
                 h0_ref, c0_ref, h1_ref, c1_ref):  # VMEM scratch, (Bt, HP) each
    T, Bt, _ = gx_ref.shape

    # Loop-invariant operands / constants, hoisted out of the serial time loop
    # (JAX does not CSE broadcasts).
    whh0 = whh0_ref[...]
    w1 = w1_ref[...]
    b1 = jnp.broadcast_to(b1_ref[...], (Bt, G))

    # Per-lane activation constants: sigmoid(x) = 0.5 + 0.5*tanh(0.5*x) for the i/f/o
    # columns, plain tanh for the g columns -> one EUP tanh over the packed gate vregs.
    lane_g = jax.lax.broadcasted_iota(jnp.int32, (Bt, G), 1)
    is_tanh_col = (lane_g >= 2 * H) & (lane_g < 3 * H)
    act_scale = jnp.where(is_tanh_col, 1.0, 0.5)
    act_shift = jnp.where(is_tanh_col, 0.0, 0.5)
    # Mask selecting the low 64 lanes of a 128-lane state vreg.
    low = jax.lax.broadcasted_iota(jnp.int32, (Bt, HP), 1) < H

    def cell(gates, c2):
        # gates: (Bt, G) packed pre-activations [i | f | g | o]; c2: (Bt, HP) = [c | c].
        act = jnp.tanh(gates * act_scale) * act_scale + act_shift  # [si | sf | tg | so]
        a_if = act[:, :HP]                           # [sig(i)  | sig(f)]
        a_go = act[:, HP:]                           # [tanh(g) | sig(o)]
        mix = jnp.where(low, a_go, c2)               # [tanh(g) | c_prev]
        prod = a_if * mix                            # [si*tg   | sf*c_prev]
        c2_new = prod + pltpu.roll(prod, H, 1)       # [c_new   | c_new]
        tanh_c = jnp.tanh(c2_new)
        ho = a_go * tanh_c                           # [  ...   | so*tanh(c_new)]
        h2_new = jnp.where(low, pltpu.roll(ho, H, 1), ho)   # [h_new | h_new]
        return h2_new, c2_new

    zeros = jnp.zeros((Bt, HP), jnp.float32)
    h0_ref[...] = zeros
    c0_ref[...] = zeros
    h1_ref[...] = zeros
    c1_ref[...] = zeros

    # Statically unrolled serial recurrence (T is a compile-time constant); the four
    # carried states are VMEM-resident so register live ranges stay bounded at Bt=128.
    # TODO(synk): if a bundle dump shows whh0/w1 vld traffic dominating, drive the MXU
    # weight-stationary with pltpu.matmul_push_rhs / matmul_acc_lhs / matmul_pop.
    for t in range(T):
        g0 = gx_ref[t] + jnp.dot(h0_ref[...], whh0,
                                 preferred_element_type=jnp.float32)
        h0, c0 = cell(g0, c0_ref[...])
        h0_ref[...] = h0
        c0_ref[...] = c0

        hx = jnp.where(low, h0, h1_ref[...])         # [h0_t | h1_{t-1}], one K=128 dot
        g1 = jnp.dot(hx, w1, preferred_element_type=jnp.float32) + b1
        h1, c1 = cell(g1, c1_ref[...])
        h1_ref[...] = h1
        c1_ref[...] = c1

    out_ref[...] = (jnp.dot(h1_ref[...], wfc_ref[...],
                            preferred_element_type=jnp.float32) + bfc_ref[...])


def init_params(key, input_size=INPUT_SIZE, hidden_size=HIDDEN_SIZE,
                output_size=OUTPUT_SIZE, output_window=OUTPUT_WINDOW):
    """PyTorch-layout parameters, uniform(-1/sqrt(H), 1/sqrt(H)) like nn.LSTM/nn.Linear."""
    h = hidden_size
    k = 1.0 / jnp.sqrt(jnp.float32(h))
    keys = jax.random.split(key, 10)

    def u(kk, shape):
        return jax.random.uniform(kk, shape, jnp.float32, -k, k)

    out_dim = output_size * output_window
    return {
        "wih0": u(keys[0], (4 * h, input_size)),            # (4H, D)
        "whh0": u(keys[1], (4 * h, h)),                      # (4H, H)
        "b0": u(keys[2], (4 * h,)) + u(keys[3], (4 * h,)),   # b_ih + b_hh
        "wih1": u(keys[4], (4 * h, h)),
        "whh1": u(keys[5], (4 * h, h)),
        "b1": u(keys[6], (4 * h,)) + u(keys[7], (4 * h,)),
        "wfc": jax.random.uniform(keys[8], (out_dim, h), jnp.float32, -k, k),
        "bfc": jax.random.uniform(keys[9], (out_dim,), jnp.float32, -k, k),
    }


def pack_params(p):
    """One-time host-side repack into the kernel layout.

    Gates stay at their natural 4*H = 256 columns [i | f | g | o] (no per-gate padding).
    Recurrent weights live in a 128-row container matching the duplicated [h | h] /
    fused [h0 | h1] state layout; unused rows are zero so duplicate lanes contribute 0.
    """
    out_dim = p["wfc"].shape[0]
    wih0_p = p["wih0"].T.astype(jnp.float32)                     # (D, G)  wrapper-only
    b0_p = p["b0"].astype(jnp.float32)                           # (G,)    wrapper-only
    whh0_p = (jnp.zeros((HP, G), jnp.float32)
              .at[:H].set(p["whh0"].T))                          # rows [W_hh0^T; 0]
    w1_p = jnp.concatenate([p["wih1"].T, p["whh1"].T],
                           axis=0).astype(jnp.float32)           # rows [W_ih1^T; W_hh1^T]
    b1_p = p["b1"].reshape(1, G).astype(jnp.float32)
    wfc_p = (jnp.zeros((HP, OUT_PAD), jnp.float32)
             .at[:H, :out_dim].set(p["wfc"].T))
    bfc_p = jnp.zeros((1, OUT_PAD), jnp.float32).at[0, :out_dim].set(p["bfc"])
    return {"wih0_p": wih0_p, "b0_p": b0_p, "whh0_p": whh0_p,
            "w1_p": w1_p, "b1_p": b1_p, "wfc_p": wfc_p, "bfc_p": bfc_p}


def _round_up(n, m):
    return ((n + m - 1) // m) * m


def lstm_timeseries_forward(x, packed):
    """x: (B, T, D) float32 -> (B, OUTPUT_WINDOW, OUTPUT_SIZE) float32."""
    B, T, D = x.shape
    out_dim = OUTPUT_SIZE * OUTPUT_WINDOW

    # Batch tile: fill MXU rows (up to 128); B > 128 yields >= 2 grid tiles so megacore
    # sharding ("parallel") can engage the second TensorCore on v7x.
    bt = min(MAX_BT, _round_up(B, 8))
    Bp = _round_up(B, bt)

    # Pad the batch and precompute the layer-0 input projection with XLA: the K = 4,
    # lane-sparse x @ W_ih0^T (+ bias) leaves the kernel, so the kernel's only streamed
    # input is a lane-dense (T, Bt, 256) block.
    x_p = jnp.zeros((Bp, T, D), jnp.float32).at[:B].set(x.astype(jnp.float32))
    gx0 = (jnp.einsum('btd,dg->tbg', x_p, packed["wih0_p"])
           + packed["b0_p"][None, None, :])                       # (T, Bp, G)

    grid = (Bp // bt,)

    out = pl.pallas_call(
        _lstm_kernel,
        out_shape=jax.ShapeDtypeStruct((Bp, OUT_PAD), jnp.float32),
        grid_spec=pltpu.PrefetchScalarGridSpec(
            num_scalar_prefetch=0,
            grid=grid,
            in_specs=[
                pl.BlockSpec((T, bt, G), lambda b: (0, b, 0)),    # gx0: tiled over batch
                pl.BlockSpec((HP, G), lambda b: (0, 0)),          # weights: grid-resident
                pl.BlockSpec((HP, G), lambda b: (0, 0)),
                pl.BlockSpec((1, G), lambda b: (0, 0)),
                pl.BlockSpec((HP, OUT_PAD), lambda b: (0, 0)),
                pl.BlockSpec((1, OUT_PAD), lambda b: (0, 0)),
            ],
            out_specs=pl.BlockSpec((bt, OUT_PAD), lambda b: (b, 0)),
            scratch_shapes=[pltpu.VMEM((bt, HP), jnp.float32)] * 4,
        ),
        compiler_params=pltpu.CompilerParams(
            dimension_semantics=("parallel",)),
    )(gx0, packed["whh0_p"], packed["w1_p"], packed["b1_p"],
      packed["wfc_p"], packed["bfc_p"])

    return out[:B, :out_dim].reshape(B, OUTPUT_WINDOW, OUTPUT_SIZE)


def _reference_forward(x, p):
    """Pure-JAX reference with PyTorch semantics (unpacked weights)."""
    B, T, D = x.shape
    h0 = c0 = h1 = c1 = jnp.zeros((B, H), jnp.float32)

    def cell(xin, hh, cc, wih, whh, b):
        g = xin @ wih.T + hh @ whh.T + b
        i = jax.nn.sigmoid(g[:, 0 * H:1 * H])
        f = jax.nn.sigmoid(g[:, 1 * H:2 * H])
        gg = jnp.tanh(g[:, 2 * H:3 * H])
        o = jax.nn.sigmoid(g[:, 3 * H:4 * H])
        c_new = f * cc + i * gg
        return o * jnp.tanh(c_new), c_new

    for t in range(T):
        h0, c0 = cell(x[:, t, :], h0, c0, p["wih0"], p["whh0"], p["b0"])
        h1, c1 = cell(h0, h1, c1, p["wih1"], p["whh1"], p["b1"])
    out = h1 @ p["wfc"].T + p["bfc"]
    return out.reshape(B, OUTPUT_WINDOW, OUTPUT_SIZE)


if __name__ == "__main__":
    key = jax.random.PRNGKey(0)
    k_param, k_x = jax.random.split(key)

    B, T = 2, 8
    x = jax.random.normal(k_x, (B, T, INPUT_SIZE), dtype=jnp.float32)
    params = init_params(k_param)
    packed = pack_params(params)

    out = lstm_timeseries_forward(x, packed)
    out = jax.block_until_ready(out)
    assert out.shape == (B, OUTPUT_WINDOW, OUTPUT_SIZE), out.shape

    ref = jax.block_until_ready(_reference_forward(x, params))
    assert jnp.allclose(out, ref, atol=1e-5, rtol=1e-5), "mismatch vs JAX reference"

    print("KERNEL_OK")
</pallas_src>

<mosaic_0001>
module attributes {stable_mosaic.version = 11 : i64} {
  func.func @_lstm_kernel(%arg0: i32, %arg1: memref<8x8x256xf32, #tpu.memory_space<vmem>>, %arg2: memref<128x256xf32, #tpu.memory_space<vmem>>, %arg3: memref<128x256xf32, #tpu.memory_space<vmem>>, %arg4: memref<1x256xf32, #tpu.memory_space<vmem>>, %arg5: memref<128x128xf32, #tpu.memory_space<vmem>>, %arg6: memref<1x128xf32, #tpu.memory_space<vmem>>, %arg7: memref<8x128xf32, #tpu.memory_space<vmem>>, %arg8: memref<8x128xf32, #tpu.memory_space<vmem>>, %arg9: memref<8x128xf32, #tpu.memory_space<vmem>>, %arg10: memref<8x128xf32, #tpu.memory_space<vmem>>, %arg11: memref<8x128xf32, #tpu.memory_space<vmem>>) attributes {dimension_semantics = [#tpu.dimension_semantics<parallel>], iteration_bounds = array<i64: 1>, scalar_prefetch = 0 : i64, scratch_operands = 4 : i64, tpu.core_type = #tpu.core_type<tc>, window_params = [{transform_indices = @transform_0, window_bounds = array<i64: 8, 8, 256>}, {pipeline_mode = #tpu.pipeline_mode<synchronous>, transform_indices = @transform_1, window_bounds = array<i64: 128, 256>}, {pipeline_mode = #tpu.pipeline_mode<synchronous>, transform_indices = @transform_2, window_bounds = array<i64: 128, 256>}, {pipeline_mode = #tpu.pipeline_mode<synchronous>, transform_indices = @transform_3, window_bounds = array<i64: 1, 256>}, {pipeline_mode = #tpu.pipeline_mode<synchronous>, transform_indices = @transform_4, window_bounds = array<i64: 128, 128>}, {pipeline_mode = #tpu.pipeline_mode<synchronous>, transform_indices = @transform_5, window_bounds = array<i64: 1, 128>}, {transform_indices = @transform_6, window_bounds = array<i64: 8, 128>}]} {
    %c0 = arith.constant 0 : index
    %c0_0 = arith.constant 0 : index
    %0 = vector.load %arg2[%c0, %c0_0] : memref<128x256xf32, #tpu.memory_space<vmem>>, vector<128x256xf32>
    %c0_1 = arith.constant 0 : index
    %c0_2 = arith.constant 0 : index
    %1 = vector.load %arg3[%c0_1, %c0_2] : memref<128x256xf32, #tpu.memory_space<vmem>>, vector<128x256xf32>
    %c0_3 = arith.constant 0 : index
    %c0_4 = arith.constant 0 : index
    %2 = vector.load %arg4[%c0_3, %c0_4] : memref<1x256xf32, #tpu.memory_space<vmem>>, vector<1x256xf32>
    %3 = vector.shape_cast %2 : vector<1x256xf32> to vector<1x256xf32>
    %4 = vector.broadcast %3 : vector<1x256xf32> to vector<8x256xf32>
    %5 = tpu.iota {dimensions = array<i32: 1>} : vector<8x256xi32>
    %c128_i32 = arith.constant 128 : i32
    %6 = vector.broadcast %c128_i32 : i32 to vector<8x256xi32>
    %7 = arith.cmpi sge, %5, %6 : vector<8x256xi32>
    %c192_i32 = arith.constant 192 : i32
    %8 = vector.broadcast %c192_i32 : i32 to vector<8x256xi32>
    %9 = arith.cmpi slt, %5, %8 : vector<8x256xi32>
    %10 = arith.andi %7, %9 : vector<8x256xi1>
    %cst = arith.constant 1.000000e+00 : f32
    %cst_5 = arith.constant 5.000000e-01 : f32
    %11 = vector.broadcast %cst : f32 to vector<8x256xf32>
    %12 = vector.broadcast %cst_5 : f32 to vector<8x256xf32>
    %13 = arith.select %10, %11, %12 : vector<8x256xi1>, vector<8x256xf32>
    %cst_6 = arith.constant 0.000000e+00 : f32
    %cst_7 = arith.constant 5.000000e-01 : f32
    %14 = vector.broadcast %cst_6 : f32 to vector<8x256xf32>
    %15 = vector.broadcast %cst_7 : f32 to vector<8x256xf32>
    %16 = arith.select %10, %14, %15 : vector<8x256xi1>, vector<8x256xf32>
    %17 = tpu.iota {dimensions = array<i32: 1>} : vector<8x128xi32>
    %c64_i32 = arith.constant 64 : i32
    %18 = vector.broadcast %c64_i32 : i32 to vector<8x128xi32>
    %19 = arith.cmpi slt, %17, %18 : vector<8x128xi32>
    %cst_8 = arith.constant 0.000000e+00 : f32
    %20 = vector.broadcast %cst_8 : f32 to vector<8x128xf32>
    %c0_9 = arith.constant 0 : index
    %c0_10 = arith.constant 0 : index
    %21 = vector.load %arg8[%c0_9, %c0_10] : memref<8x128xf32, #tpu.memory_space<vmem>>, vector<8x128xf32>
    tpu.vector_store %arg8[%c0_9, %c0_10], %20 {strides = array<i32>} : memref<8x128xf32, #tpu.memory_space<vmem>>, vector<8x128xf32>,
    %c0_11 = arith.constant 0 : index
    %c0_12 = arith.constant 0 : index
    %22 = vector.load %arg9[%c0_11, %c0_12] : memref<8x128xf32, #tpu.memory_space<vmem>>, vector<8x128xf32>
    tpu.vector_store %arg9[%c0_11, %c0_12], %20 {strides = array<i32>} : memref<8x128xf32, #tpu.memory_space<vmem>>, vector<8x128xf32>,
    %c0_13 = arith.constant 0 : index
    %c0_14 = arith.constant 0 : index
    %23 = vector.load %arg10[%c0_13, %c0_14] : memref<8x128xf32, #tpu.memory_space<vmem>>, vector<8x128xf32>
    tpu.vector_store %arg10[%c0_13, %c0_14], %20 {strides = array<i32>} : memref<8x128xf32, #tpu.memory_space<vmem>>, vector<8x128xf32>,
    %c0_15 = arith.constant 0 : index
    %c0_16 = arith.constant 0 : index
    %24 = vector.load %arg11[%c0_15, %c0_16] : memref<8x128xf32, #tpu.memory_space<vmem>>, vector<8x128xf32>
    tpu.vector_store %arg11[%c0_15, %c0_16], %20 {strides = array<i32>} : memref<8x128xf32, #tpu.memory_space<vmem>>, vector<8x128xf32>,
    %c0_17 = arith.constant 0 : index
    %c0_18 = arith.constant 0 : index
    %c0_19 = arith.constant 0 : index
    %25 = vector.load %arg1[%c0_17, %c0_18, %c0_19] : memref<8x8x256xf32, #tpu.memory_space<vmem>>, vector<1x8x256xf32>
    %26 = vector.shape_cast %25 : vector<1x8x256xf32> to vector<8x256xf32>
    %c0_20 = arith.constant 0 : index
    %c0_21 = arith.constant 0 : index
    %27 = vector.load %arg8[%c0_20, %c0_21] : memref<8x128xf32, #tpu.memory_space<vmem>>, vector<8x128xf32>
    %cst_22 = arith.constant dense<0.000000e+00> : vector<8x256xf32>
    %28 = tpu.matmul %27, %0, %cst_22 {dimension_numbers = #tpu.dot_dimension_numbers<[1], [0], [0], [1], [0, 0, 1, 1], [], []>} : vector<8x128xf32>, vector<128x256xf32>, vector<8x256xf32> -> vector<8x256xf32>
    %29 = arith.addf %26, %28 : vector<8x256xf32>
    %c0_23 = arith.constant 0 : index
    %c0_24 = arith.constant 0 : index
    %30 = vector.load %arg9[%c0_23, %c0_24] : memref<8x128xf32, #tpu.memory_space<vmem>>, vector<8x128xf32>
    %31 = arith.mulf %29, %13 : vector<8x256xf32>
    %32 = math.tanh %31 : vector<8x256xf32>
    %33 = arith.mulf %32, %13 : vector<8x256xf32>
    %34 = arith.addf %33, %16 : vector<8x256xf32>
    %35 = vector.extract_strided_slice %34 {offsets = [0, 0], sizes = [8, 128], strides = [1, 1]} : vector<8x256xf32> to vector<8x128xf32>
    %36 = vector.extract_strided_slice %34 {offsets = [0, 128], sizes = [8, 128], strides = [1, 1]} : vector<8x256xf32> to vector<8x128xf32>
    %37 = arith.select %19, %36, %30 : vector<8x128xi1>, vector<8x128xf32>
    %38 = arith.mulf %35, %37 : vector<8x128xf32>
    %c64_i32_25 = arith.constant 64 : i32
    %39 = tpu.dynamic_rotate %38 by %c64_i32_25 dim 1 : vector<8x128xf32>, i32 -> vector<8x128xf32>
    %40 = arith.addf %38, %39 : vector<8x128xf32>
    %41 = math.tanh %40 : vector<8x128xf32>
    %42 = arith.mulf %36, %41 : vector<8x128xf32>
    %c64_i32_26 = arith.constant 64 : i32
    %43 = tpu.dynamic_rotate %42 by %c64_i32_26 dim 1 : vector<8x128xf32>, i32 -> vector<8x128xf32>
    %44 = arith.select %19, %43, %42 : vector<8x128xi1>, vector<8x128xf32>
    %c0_27 = arith.constant 0 : index
    %c0_28 = arith.constant 0 : index
    %45 = vector.load %arg8[%c0_27, %c0_28] : memref<8x128xf32, #tpu.memory_space<vmem>>, vector<8x128xf32>
    tpu.vector_store %arg8[%c0_27, %c0_28], %44 {strides = array<i32>} : memref<8x128xf32, #tpu.memory_space<vmem>>, vector<8x128xf32>,
    %c0_29 = arith.constant 0 : index
    %c0_30 = arith.constant 0 : index
    %46 = vector.load %arg9[%c0_29, %c0_30] : memref<8x128xf32, #tpu.memory_space<vmem>>, vector<8x128xf32>
    tpu.vector_store %arg9[%c0_29, %c0_30], %40 {strides = array<i32>} : memref<8x128xf32, #tpu.memory_space<vmem>>, vector<8x128xf32>,
    %c0_31 = arith.constant 0 : index
    %c0_32 = arith.constant 0 : index
    %47 = vector.load %arg10[%c0_31, %c0_32] : memref<8x128xf32, #tpu.memory_space<vmem>>, vector<8x128xf32>
    %48 = arith.select %19, %44, %47 : vector<8x128xi1>, vector<8x128xf32>
    %cst_33 = arith.constant dense<0.000000e+00> : vector<8x256xf32>
    %49 = tpu.matmul %48, %1, %cst_33 {dimension_numbers = #tpu.dot_dimension_numbers<[1], [0], [0], [1], [0, 0, 1, 1], [], []>} : vector<8x128xf32>, vector<128x256xf32>, vector<8x256xf32> -> vector<8x256xf32>
    %50 = arith.addf %49, %4 : vector<8x256xf32>
    %c0_34 = arith.constant 0 : index
    %c0_35 = arith.constant 0 : index
    %51 = vector.load %arg11[%c0_34, %c0_35] : memref<8x128xf32, #tpu.memory_space<vmem>>, vector<8x128xf32>
    %52 = arith.mulf %50, %13 : vector<8x256xf32>
    %53 = math.tanh %52 : vector<8x256xf32>
    %54 = arith.mulf %53, %13 : vector<8x256xf32>
    %55 = arith.addf %54, %16 : vector<8x256xf32>
    %56 = vector.extract_strided_slice %55 {offsets = [0, 0], sizes = [8, 128], strides = [1, 1]} : vector<8x256xf32> to vector<8x128xf32>
    %57 = vector.extract_strided_slice %55 {offsets = [0, 128], sizes = [8, 128], strides = [1, 1]} : vector<8x256xf32> to vector<8x128xf32>
    %58 = arith.select %19, %57, %51 : vector<8x128xi1>, vector<8x128xf32>
    %59 = arith.mulf %56, %58 : vector<8x128xf32>
    %c64_i32_36 = arith.constant 64 : i32
    %60 = tpu.dynamic_rotate %59 by %c64_i32_36 dim 1 : vector<8x128xf32>, i32 -> vector<8x128xf32>
    %61 = arith.addf %59, %60 : vector<8x128xf32>
    %62 = math.tanh %61 : vector<8x128xf32>
    %63 = arith.mulf %57, %62 : vector<8x128xf32>
    %c64_i32_37 = arith.constant 64 : i32
    %64 = tpu.dynamic_rotate %63 by %c64_i32_37 dim 1 : vector<8x128xf32>, i32 -> vector<8x128xf32>
    %65 = arith.select %19, %64, %63 : vector<8x128xi1>, vector<8x128xf32>
    %c0_38 = arith.constant 0 : index
    %c0_39 = arith.constant 0 : index
    %66 = vector.load %arg10[%c0_38, %c0_39] : memref<8x128xf32, #tpu.memory_space<vmem>>, vector<8x128xf32>
    tpu.vector_store %arg10[%c0_38, %c0_39], %65 {strides = array<i32>} : memref<8x128xf32, #tpu.memory_space<vmem>>, vector<8x128xf32>,
    %c0_40 = arith.constant 0 : index
    %c0_41 = arith.constant 0 : index
    %67 = vector.load %arg11[%c0_40, %c0_41] : memref<8x128xf32, #tpu.memory_space<vmem>>, vector<8x128xf32>
    tpu.vector_store %arg11[%c0_40, %c0_41], %61 {strides = array<i32>} : memref<8x128xf32, #tpu.memory_space<vmem>>, vector<8x128xf32>,
    %c1 = arith.constant 1 : index
    %c0_42 = arith.constant 0 : index
    %c0_43 = arith.constant 0 : index
    %68 = vector.load %arg1[%c1, %c0_42, %c0_43] : memref<8x8x256xf32, #tpu.memory_space<vmem>>, vector<1x8x256xf32>
    %69 = vector.shape_cast %68 : vector<1x8x256xf32> to vector<8x256xf32>
    %c0_44 = arith.constant 0 : index
    %c0_45 = arith.constant 0 : index
    %70 = vector.load %arg8[%c0_44, %c0_45] : memref<8x128xf32, #tpu.memory_space<vmem>>, vector<8x128xf32>
    %cst_46 = arith.constant dense<0.000000e+00> : vector<8x256xf32>
    %71 = tpu.matmul %70, %0, %cst_46 {dimension_numbers = #tpu.dot_dimension_numbers<[1], [0], [0], [1], [0, 0, 1, 1], [], []>} : vector<8x128xf32>, vector<128x256xf32>, vector<8x256xf32> -> vector<8x256xf32>
    %72 = arith.addf %69, %71 : vector<8x256xf32>
    %c0_47 = arith.constant 0 : index
    %c0_48 = arith.constant 0 : index
    %73 = vector.load %arg9[%c0_47, %c0_48] : memref<8x128xf32, #tpu.memory_space<vmem>>, vector<8x128xf32>
    %74 = arith.mulf %72, %13 : vector<8x256xf32>
    %75 = math.tanh %74 : vector<8x256xf32>
    %76 = arith.mulf %75, %13 : vector<8x256xf32>
    %77 = arith.addf %76, %16 : vector<8x256xf32>
    %78 = vector.extract_strided_slice %77 {offsets = [0, 0], sizes = [8, 128], strides = [1, 1]} : vector<8x256xf32> to vector<8x128xf32>
    %79 = vector.extract_strided_slice %77 {offsets = [0, 128], sizes = [8, 128], strides = [1, 1]} : vector<8x256xf32> to vector<8x128xf32>
    %80 = arith.select %19, %79, %73 : vector<8x128xi1>, vector<8x128xf32>
    %81 = arith.mulf %78, %80 : vector<8x128xf32>
    %c64_i32_49 = arith.constant 64 : i32
    %82 = tpu.dynamic_rotate %81 by %c64_i32_49 dim 1 : vector<8x128xf32>, i32 -> vector<8x128xf32>
    %83 = arith.addf %81, %82 : vector<8x128xf32>
    %84 = math.tanh %83 : vector<8x128xf32>
    %85 = arith.mulf %79, %84 : vector<8x128xf32>
    %c64_i32_50 = arith.constant 64 : i32
    %86 = tpu.dynamic_rotate %85 by %c64_i32_50 dim 1 : vector<8x128xf32>, i32 -> vector<8x128xf32>
    %87 = arith.select %19, %86, %85 : vector<8x128xi1>, vector<8x128xf32>
    %c0_51 = arith.constant 0 : index
    %c0_52 = arith.constant 0 : index
    %88 = vector.load %arg8[%c0_51, %c0_52] : memref<8x128xf32, #tpu.memory_space<vmem>>, vector<8x128xf32>
    tpu.vector_store %arg8[%c0_51, %c0_52], %87 {strides = array<i32>} : memref<8x128xf32, #tpu.memory_space<vmem>>, vector<8x128xf32>,
    %c0_53 = arith.constant 0 : index
    %c0_54 = arith.constant 0 : index
    %89 = vector.load %arg9[%c0_53, %c0_54] : memref<8x128xf32, #tpu.memory_space<vmem>>, vector<8x128xf32>
    tpu.vector_store %arg9[%c0_53, %c0_54], %83 {strides = array<i32>} : memref<8x128xf32, #tpu.memory_space<vmem>>, vector<8x128xf32>,
    %c0_55 = arith.constant 0 : index
    %c0_56 = arith.constant 0 : index
    %90 = vector.load %arg10[%c0_55, %c0_56] : memref<8x128xf32, #tpu.memory_space<vmem>>, vector<8x128xf32>
    %91 = arith.select %19, %87, %90 : vector<8x128xi1>, vector<8x128xf32>
    %cst_57 = arith.constant dense<0.000000e+00> : vector<8x256xf32>
    %92 = tpu.matmul %91, %1, %cst_57 {dimension_numbers = #tpu.dot_dimension_numbers<[1], [0], [0], [1], [0, 0, 1, 1], [], []>} : vector<8x128xf32>, vector<128x256xf32>, vector<8x256xf32> -> vector<8x256xf32>
    %93 = arith.addf %92, %4 : vector<8x256xf32>
    %c0_58 = arith.constant 0 : index
    %c0_59 = arith.constant 0 : index
    %94 = vector.load %arg11[%c0_58, %c0_59] : memref<8x128xf32, #tpu.memory_space<vmem>>, vector<8x128xf32>
    %95 = arith.mulf %93, %13 : vector<8x256xf32>
    %96 = math.tanh %95 : vector<8x256xf32>
    %97 = arith.mulf %96, %13 : vector<8x256xf32>
    %98 = arith.addf %97, %16 : vector<8x256xf32>
    %99 = vector.extract_strided_slice %98 {offsets = [0, 0], sizes = [8, 128], strides = [1, 1]} : vector<8x256xf32> to vector<8x128xf32>
    %100 = vector.extract_strided_slice %98 {offsets = [0, 128], sizes = [8, 128], strides = [1, 1]} : vector<8x256xf32> to vector<8x128xf32>
    %101 = arith.select %19, %100, %94 : vector<8x128xi1>, vector<8x128xf32>
    %102 = arith.mulf %99, %101 : vector<8x128xf32>
    %c64_i32_60 = arith.constant 64 : i32
    %103 = tpu.dynamic_rotate %102 by %c64_i32_60 dim 1 : vector<8x128xf32>, i32 -> vector<8x128xf32>
    %104 = arith.addf %102, %103 : vector<8x128xf32>
    %105 = math.tanh %104 : vector<8x128xf32>
    %106 = arith.mulf %100, %105 : vector<8x128xf32>
    %c64_i32_61 = arith.constant 64 : i32
    %107 = tpu.dynamic_rotate %106 by %c64_i32_61 dim 1 : vector<8x128xf32>, i32 -> vector<8x128xf32>
    %108 = arith.select %19, %107, %106 : vector<8x128xi1>, vector<8x128xf32>
    %c0_62 = arith.constant 0 : index
    %c0_63 = arith.constant 0 : index
    %109 = vector.load %arg10[%c0_62, %c0_63] : memref<8x128xf32, #tpu.memory_space<vmem>>, vector<8x128xf32>
    tpu.vector_store %arg10[%c0_62, %c0_63], %108 {strides = array<i32>} : memref<8x128xf32, #tpu.memory_space<vmem>>, vector<8x128xf32>,
    %c0_64 = arith.constant 0 : index
    %c0_65 = arith.constant 0 : index
    %110 = vector.load %arg11[%c0_64, %c0_65] : memref<8x128xf32, #tpu.memory_space<vmem>>, vector<8x128xf32>
    tpu.vector_store %arg11[%c0_64, %c0_65], %104 {strides = array<i32>} : memref<8x128xf32, #tpu.memory_space<vmem>>, vector<8x128xf32>,
    %c2 = arith.constant 2 : index
    %c0_66 = arith.constant 0 : index
    %c0_67 = arith.constant 0 : index
    %111 = vector.load %arg1[%c2, %c0_66, %c0_67] : memref<8x8x256xf32, #tpu.memory_space<vmem>>, vector<1x8x256xf32>
    %112 = vector.shape_cast %111 : vector<1x8x256xf32> to vector<8x256xf32>
    %c0_68 = arith.constant 0 : index
    %c0_69 = arith.constant 0 : index
    %113 = vector.load %arg8[%c0_68, %c0_69] : memref<8x128xf32, #tpu.memory_space<vmem>>, vector<8x128xf32>
    %cst_70 = arith.constant dense<0.000000e+00> : vector<8x256xf32>
    %114 = tpu.matmul %113, %0, %cst_70 {dimension_numbers = #tpu.dot_dimension_numbers<[1], [0], [0], [1], [0, 0, 1, 1], [], []>} : vector<8x128xf32>, vector<128x256xf32>, vector<8x256xf32> -> vector<8x256xf32>
    %115 = arith.addf %112, %114 : vector<8x256xf32>
    %c0_71 = arith.constant 0 : index
    %c0_72 = arith.constant 0 : index
    %116 = vector.load %arg9[%c0_71, %c0_72] : memref<8x128xf32, #tpu.memory_space<vmem>>, vector<8x128xf32>
    %117 = arith.mulf %115, %13 : vector<8x256xf32>
    %118 = math.tanh %117 : vector<8x256xf32>
    %119 = arith.mulf %118, %13 : vector<8x256xf32>
    %120 = arith.addf %119, %16 : vector<8x256xf32>
    %121 = vector.extract_strided_slice %120 {offsets = [0, 0], sizes = [8, 128], strides = [1, 1]} : vector<8x256xf32> to vector<8x128xf32>
    %122 = vector.extract_strided_slice %120 {offsets = [0, 128], sizes = [8, 128], strides = [1, 1]} : vector<8x256xf32> to vector<8x128xf32>
    %123 = arith.select %19, %122, %116 : vector<8x128xi1>, vector<8x128xf32>
    %124 = arith.mulf %121, %123 : vector<8x128xf32>
    %c64_i32_73 = arith.constant 64 : i32
    %125 = tpu.dynamic_rotate %124 by %c64_i32_73 dim 1 : vector<8x128xf32>, i32 -> vector<8x128xf32>
    %126 = arith.addf %124, %125 : vector<8x128xf32>
    %127 = math.tanh %126 : vector<8x128xf32>
    %128 = arith.mulf %122, %127 : vector<8x128xf32>
    %c64_i32_74 = arith.constant 64 : i32
    %129 = tpu.dynamic_rotate %128 by %c64_i32_74 dim 1 : vector<8x128xf32>, i32 -> vector<8x128xf32>
    %130 = arith.select %19, %129, %128 : vector<8x128xi1>, vector<8x128xf32>
    %c0_75 = arith.constant 0 : index
    %c0_76 = arith.constant 0 : index
    %131 = vector.load %arg8[%c0_75, %c0_76] : memref<8x128xf32, #tpu.memory_space<vmem>>, vector<8x128xf32>
    tpu.vector_store %arg8[%c0_75, %c0_76], %130 {strides = array<i32>} : memref<8x128xf32, #tpu.memory_space<vmem>>, vector<8x128xf32>,
    %c0_77 = arith.constant 0 : index
    %c0_78 = arith.constant 0 : index
    %132 = vector.load %arg9[%c0_77, %c0_78] : memref<8x128xf32, #tpu.memory_space<vmem>>, vector<8x128xf32>
    tpu.vector_store %arg9[%c0_77, %c0_78], %126 {strides = array<i32>} : memref<8x128xf32, #tpu.memory_space<vmem>>, vector<8x128xf32>,
    %c0_79 = arith.constant 0 : index
    %c0_80 = arith.constant 0 : index
    %133 = vector.load %arg10[%c0_79, %c0_80] : memref<8x128xf32, #tpu.memory_space<vmem>>, vector<8x128xf32>
    %134 = arith.select %19, %130, %133 : vector<8x128xi1>, vector<8x128xf32>
    %cst_81 = arith.constant dense<0.000000e+00> : vector<8x256xf32>
    %135 = tpu.matmul %134, %1, %cst_81 {dimension_numbers = #tpu.dot_dimension_numbers<[1], [0], [0], [1], [0, 0, 1, 1], [], []>} : vector<8x128xf32>, vector<128x256xf32>, vector<8x256xf32> -> vector<8x256xf32>
    %136 = arith.addf %135, %4 : vector<8x256xf32>
    %c0_82 = arith.constant 0 : index
    %c0_83 = arith.constant 0 : index
    %137 = vector.load %arg11[%c0_82, %c0_83] : memref<8x128xf32, #tpu.memory_space<vmem>>, vector<8x128xf32>
    %138 = arith.mulf %136, %13 : vector<8x256xf32>
    %139 = math.tanh %138 : vector<8x256xf32>
    %140 = arith.mulf %139, %13 : vector<8x256xf32>
    %141 = arith.addf %140, %16 : vector<8x256xf32>
    %142 = vector.extract_strided_slice %141 {offsets = [0, 0], sizes = [8, 128], strides = [1, 1]} : vector<8x256xf32> to vector<8x128xf32>
    %143 = vector.extract_strided_slice %141 {offsets = [0, 128], sizes = [8, 128], strides = [1, 1]} : vector<8x256xf32> to vector<8x128xf32>
    %144 = arith.select %19, %143, %137 : vector<8x128xi1>, vector<8x128xf32>
    %145 = arith.mulf %142, %144 : vector<8x128xf32>
    %c64_i32_84 = arith.constant 64 : i32
    %146 = tpu.dynamic_rotate %145 by %c64_i32_84 dim 1 : vector<8x128xf32>, i32 -> vector<8x128xf32>
    %147 = arith.addf %145, %146 : vector<8x128xf32>
    %148 = math.tanh %147 : vector<8x128xf32>
    %149 = arith.mulf %143, %148 : vector<8x128xf32>
    %c64_i32_85 = arith.constant 64 : i32
    %150 = tpu.dynamic_rotate %149 by %c64_i32_85 dim 1 : vector<8x128xf32>, i32 -> vector<8x128xf32>
    %151 = arith.select %19, %150, %149 : vector<8x128xi1>, vector<8x128xf32>
    %c0_86 = arith.constant 0 : index
    %c0_87 = arith.constant 0 : index
    %152 = vector.load %arg10[%c0_86, %c0_87] : memref<8x128xf32, #tpu.memory_space<vmem>>, vector<8x128xf32>
    tpu.vector_store %arg10[%c0_86, %c0_87], %151 {strides = array<i32>} : memref<8x128xf32, #tpu.memory_space<vmem>>, vector<8x128xf32>,
    %c0_88 = arith.constant 0 : index
    %c0_89 = arith.constant 0 : index
    %153 = vector.load %arg11[%c0_88, %c0_89] : memref<8x128xf32, #tpu.memory_space<vmem>>, vector<8x128xf32>
    tpu.vector_store %arg11[%c0_88, %c0_89], %147 {strides = array<i32>} : memref<8x128xf32, #tpu.memory_space<vmem>>, vector<8x128xf32>,
    %c3 = arith.constant 3 : index
    %c0_90 = arith.constant 0 : index
    %c0_91 = arith.constant 0 : index
    %154 = vector.load %arg1[%c3, %c0_90, %c0_91] : memref<8x8x256xf32, #tpu.memory_space<vmem>>, vector<1x8x256xf32>
    %155 = vector.shape_cast %154 : vector<1x8x256xf32> to vector<8x256xf32>
    %c0_92 = arith.constant 0 : index
    %c0_93 = arith.constant 0 : index
    %156 = vector.load %arg8[%c0_92, %c0_93] : memref<8x128xf32, #tpu.memory_space<vmem>>, vector<8x128xf32>
    %cst_94 = arith.constant dense<0.000000e+00> : vector<8x256xf32>
    %157 = tpu.matmul %156, %0, %cst_94 {dimension_numbers = #tpu.dot_dimension_numbers<[1], [0], [0], [1], [0, 0, 1, 1], [], []>} : vector<8x128xf32>, vector<128x256xf32>, vector<8x256xf32> -> vector<8x256xf32>
    %158 = arith.addf %155, %157 : vector<8x256xf32>
    %c0_95 = arith.constant 0 : index
    %c0_96 = arith.constant 0 : index
    %159 = vector.load %arg9[%c0_95, %c0_96] : memref<8x128xf32, #tpu.memory_space<vmem>>, vector<8x128xf32>
    %160 = arith.mulf %158, %13 : vector<8x256xf32>
    %161 = math.tanh %160 : vector<8x256xf32>
    %162 = arith.mulf %161, %13 : vector<8x256xf32>
    %163 = arith.addf %162, %16 : vector<8x256xf32>
    %164 = vector.extract_strided_slice %163 {offsets = [0, 0], sizes = [8, 128], strides = [1, 1]} : vector<8x256xf32> to vector<8x128xf32>
    %165 = vector.extract_strided_slice %163 {offsets = [0, 128], sizes = [8, 128], strides = [1, 1]} : vector<8x256xf32> to vector<8x128xf32>
    %166 = arith.select %19, %165, %159 : vector<8x128xi1>, vector<8x128xf32>
    %167 = arith.mulf %164, %166 : vector<8x128xf32>
    %c64_i32_97 = arith.constant 64 : i32
    %168 = tpu.dynamic_rotate %167 by %c64_i32_97 dim 1 : vector<8x128xf32>, i32 -> vector<8x128xf32>
    %169 = arith.addf %167, %168 : vector<8x128xf32>
    %170 = math.tanh %169 : vector<8x128xf32>
    %171 = arith.mulf %165, %170 : vector<8x128xf32>
    %c64_i32_98 = arith.constant 64 : i32
    %172 = tpu.dynamic_rotate %171 by %c64_i32_98 dim 1 : vector<8x128xf32>, i32 -> vector<8x128xf32>
    %173 = arith.select %19, %172, %171 : vector<8x128xi1>, vector<8x128xf32>
    %c0_99 = arith.constant 0 : index
    %c0_100 = arith.constant 0 : index
    %174 = vector.load %arg8[%c0_99, %c0_100] : memref<8x128xf32, #tpu.memory_space<vmem>>, vector<8x128xf32>
    tpu.vector_store %arg8[%c0_99, %c0_100], %173 {strides = array<i32>} : memref<8x128xf32, #tpu.memory_space<vmem>>, vector<8x128xf32>,
    %c0_101 = arith.constant 0 : index
    %c0_102 = arith.constant 0 : index
    %175 = vector.load %arg9[%c0_101, %c0_102] : memref<8x128xf32, #tpu.memory_space<vmem>>, vector<8x128xf32>
    tpu.vector_store %arg9[%c0_101, %c0_102], %169 {strides = array<i32>} : memref<8x128xf32, #tpu.memory_space<vmem>>, vector<8x128xf32>,
    %c0_103 = arith.constant 0 : index
    %c0_104 = arith.constant 0 : index
    %176 = vector.load %arg10[%c0_103, %c0_104] : memref<8x128xf32, #tpu.memory_space<vmem>>, vector<8x128xf32>
    %177 = arith.select %19, %173, %176 : vector<8x128xi1>, vector<8x128xf32>
    %cst_105 = arith.constant dense<0.000000e+00> : vector<8x256xf32>
    %178 = tpu.matmul %177, %1, %cst_105 {dimension_numbers = #tpu.dot_dimension_numbers<[1], [0], [0], [1], [0, 0, 1, 1], [], []>} : vector<8x128xf32>, vector<128x256xf32>, vector<8x256xf32> -> vector<8x256xf32>
    %179 = arith.addf %178, %4 : vector<8x256xf32>
    %c0_106 = arith.constant 0 : index
    %c0_107 = arith.constant 0 : index
    %180 = vector.load %arg11[%c0_106, %c0_107] : memref<8x128xf32, #tpu.memory_space<vmem>>, vector<8x128xf32>
    %181 = arith.mulf %179, %13 : vector<8x256xf32>
    %182 = math.tanh %181 : vector<8x256xf32>
    %183 = arith.mulf %182, %13 : vector<8x256xf32>
    %184 = arith.addf %183, %16 : vector<8x256xf32>
    %185 = vector.extract_strided_slice %184 {offsets = [0, 0], sizes = [8, 128], strides = [1, 1]} : vector<8x256xf32> to vector<8x128xf32>
    %186 = vector.extract_strided_slice %184 {offsets = [0, 128], sizes = [8, 128], strides = [1, 1]} : vector<8x256xf32> to vector<8x128xf32>
    %187 = arith.select %19, %186, %180 : vector<8x128xi1>, vector<8x128xf32>
    %188 = arith.mulf %185, %187 : vector<8x128xf32>
    %c64_i32_108 = arith.constant 64 : i32
    %189 = tpu.dynamic_rotate %188 by %c64_i32_108 dim 1 : vector<8x128xf32>, i32 -> vector<8x128xf32>
    %190 = arith.addf %188, %189 : vector<8x128xf32>
    %191 = math.tanh %190 : vector<8x128xf32>
    %192 = arith.mulf %186, %191 : vector<8x128xf32>
    %c64_i32_109 = arith.constant 64 : i32
    %193 = tpu.dynamic_rotate %192 by %c64_i32_109 dim 1 : vector<8x128xf32>, i32 -> vector<8x128xf32>
    %194 = arith.select %19, %193, %192 : vector<8x128xi1>, vector<8x128xf32>
    %c0_110 = arith.constant 0 : index
    %c0_111 = arith.constant 0 : index
    %195 = vector.load %arg10[%c0_110, %c0_111] : memref<8x128xf32, #tpu.memory_space<vmem>>, vector<8x128xf32>
    tpu.vector_store %arg10[%c0_110, %c0_111], %194 {strides = array<i32>} : memref<8x128xf32, #tpu.memory_space<vmem>>, vector<8x128xf32>,
    %c0_112 = arith.constant 0 : index
    %c0_113 = arith.constant 0 : index
    %196 = vector.load %arg11[%c0_112, %c0_113] : memref<8x128xf32, #tpu.memory_space<vmem>>, vector<8x128xf32>
    tpu.vector_store %arg11[%c0_112, %c0_113], %190 {strides = array<i32>} : memref<8x128xf32, #tpu.memory_space<vmem>>, vector<8x128xf32>,
    %c4 = arith.constant 4 : index
    %c0_114 = arith.constant 0 : index
    %c0_115 = arith.constant 0 : index
    %197 = vector.load %arg1[%c4, %c0_114, %c0_115] : memref<8x8x256xf32, #tpu.memory_space<vmem>>, vector<1x8x256xf32>
    %198 = vector.shape_cast %197 : vector<1x8x256xf32> to vector<8x256xf32>
    %c0_116 = arith.constant 0 : index
    %c0_117 = arith.constant 0 : index
    %199 = vector.load %arg8[%c0_116, %c0_117] : memref<8x128xf32, #tpu.memory_space<vmem>>, vector<8x128xf32>
    %cst_118 = arith.constant dense<0.000000e+00> : vector<8x256xf32>
    %200 = tpu.matmul %199, %0, %cst_118 {dimension_numbers = #tpu.dot_dimension_numbers<[1], [0], [0], [1], [0, 0, 1, 1], [], []>} : vector<8x128xf32>, vector<128x256xf32>, vector<8x256xf32> -> vector<8x256xf32>
    %201 = arith.addf %198, %200 : vector<8x256xf32>
    %c0_119 = arith.constant 0 : index
    %c0_120 = arith.constant 0 : index
    %202 = vector.load %arg9[%c0_119, %c0_120] : memref<8x128xf32, #tpu.memory_space<vmem>>, vector<8x128xf32>
    %203 = arith.mulf %201, %13 : vector<8x256xf32>
    %204 = math.tanh %203 : vector<8x256xf32>
    %205 = arith.mulf %204, %13 : vector<8x256xf32>
    %206 = arith.addf %205, %16 : vector<8x256xf32>
    %207 = vector.extract_strided_slice %206 {offsets = [0, 0], sizes = [8, 128], strides = [1, 1]} : vector<8x256xf32> to vector<8x128xf32>
    %208 = vector.extract_strided_slice %206 {offsets = [0, 128], sizes = [8, 128], strides = [1, 1]} : vector<8x256xf32> to vector<8x128xf32>
    %209 = arith.select %19, %208, %202 : vector<8x128xi1>, vector<8x128xf32>
    %210 = arith.mulf %207, %209 : vector<8x128xf32>
    %c64_i32_121 = arith.constant 64 : i32
    %211 = tpu.dynamic_rotate %210 by %c64_i32_121 dim 1 : vector<8x128xf32>, i32 -> vector<8x128xf32>
    %212 = arith.addf %210, %211 : vector<8x128xf32>
    %213 = math.tanh %212 : vector<8x128xf32>
    %214 = arith.mulf %208, %213 : vector<8x128xf32>
    %c64_i32_122 = arith.constant 64 : i32
    %215 = tpu.dynamic_rotate %214 by %c64_i32_122 dim 1 : vector<8x128xf32>, i32 -> vector<8x128xf32>
    %216 = arith.select %19, %215, %214 : vector<8x128xi1>, vector<8x128xf32>
    %c0_123 = arith.constant 0 : index
    %c0_124 = arith.constant 0 : index
    %217 = vector.load %arg8[%c0_123, %c0_124] : memref<8x128xf32, #tpu.memory_space<vmem>>, vector<8x128xf32>
    tpu.vector_store %arg8[%c0_123, %c0_124], %216 {strides = array<i32>} : memref<8x128xf32, #tpu.memory_space<vmem>>, vector<8x128xf32>,
    %c0_125 = arith.constant 0 : index
    %c0_126 = arith.constant 0 : index
    %218 = vector.load %arg9[%c0_125, %c0_126] : memref<8x128xf32, #tpu.memory_space<vmem>>, vector<8x128xf32>
    tpu.vector_store %arg9[%c0_125, %c0_126], %212 {strides = array<i32>} : memref<8x128xf32, #tpu.memory_space<vmem>>, vector<8x128xf32>,
    %c0_127 = arith.constant 0 : index
    %c0_128 = arith.constant 0 : index
    %219 = vector.load %arg10[%c0_127, %c0_128] : memref<8x128xf32, #tpu.memory_space<vmem>>, vector<8x128xf32>
    %220 = arith.select %19, %216, %219 : vector<8x128xi1>, vector<8x128xf32>
    %cst_129 = arith.constant dense<0.000000e+00> : vector<8x256xf32>
    %221 = tpu.matmul %220, %1, %cst_129 {dimension_numbers = #tpu.dot_dimension_numbers<[1], [0], [0], [1], [0, 0, 1, 1], [], []>} : vector<8x128xf32>, vector<128x256xf32>, vector<8x256xf32> -> vector<8x256xf32>
    %222 = arith.addf %221, %4 : vector<8x256xf32>
    %c0_130 = arith.constant 0 : index
    %c0_131 = arith.constant 0 : index
    %223 = vector.load %arg11[%c0_130, %c0_131] : memref<8x128xf32, #tpu.memory_space<vmem>>, vector<8x128xf32>
    %224 = arith.mulf %222, %13 : vector<8x256xf32>
    %225 = math.tanh %224 : vector<8x256xf32>
    %226 = arith.mulf %225, %13 : vector<8x256xf32>
    %227 = arith.addf %226, %16 : vector<8x256xf32>
    %228 = vector.extract_strided_slice %227 {offsets = [0, 0], sizes = [8, 128], strides = [1, 1]} : vector<8x256xf32> to vector<8x128xf32>
    %229 = vector.extract_strided_slice %227 {offsets = [0, 128], sizes = [8, 128], strides = [1, 1]} : vector<8x256xf32> to vector<8x128xf32>
    %230 = arith.select %19, %229, %223 : vector<8x128xi1>, vector<8x128xf32>
    %231 = arith.mulf %228, %230 : vector<8x128xf32>
    %c64_i32_132 = arith.constant 64 : i32
    %232 = tpu.dynamic_rotate %231 by %c64_i32_132 dim 1 : vector<8x128xf32>, i32 -> vector<8x128xf32>
    %233 = arith.addf %231, %232 : vector<8x128xf32>
    %234 = math.tanh %233 : vector<8x128xf32>
    %235 = arith.mulf %229, %234 : vector<8x128xf32>
    %c64_i32_133 = arith.constant 64 : i32
    %236 = tpu.dynamic_rotate %235 by %c64_i32_133 dim 1 : vector<8x128xf32>, i32 -> vector<8x128xf32>
    %237 = arith.select %19, %236, %235 : vector<8x128xi1>, vector<8x128xf32>
    %c0_134 = arith.constant 0 : index
    %c0_135 = arith.constant 0 : index
    %238 = vector.load %arg10[%c0_134, %c0_135] : memref<8x128xf32, #tpu.memory_space<vmem>>, vector<8x128xf32>
    tpu.vector_store %arg10[%c0_134, %c0_135], %237 {strides = array<i32>} : memref<8x128xf32, #tpu.memory_space<vmem>>, vector<8x128xf32>,
    %c0_136 = arith.constant 0 : index
    %c0_137 = arith.constant 0 : index
    %239 = vector.load %arg11[%c0_136, %c0_137] : memref<8x128xf32, #tpu.memory_space<vmem>>, vector<8x128xf32>
    tpu.vector_store %arg11[%c0_136, %c0_137], %233 {strides = array<i32>} : memref<8x128xf32, #tpu.memory_space<vmem>>, vector<8x128xf32>,
    %c5 = arith.constant 5 : index
    %c0_138 = arith.constant 0 : index
    %c0_139 = arith.constant 0 : index
    %240 = vector.load %arg1[%c5, %c0_138, %c0_139] : memref<8x8x256xf32, #tpu.memory_space<vmem>>, vector<1x8x256xf32>
    %241 = vector.shape_cast %240 : vector<1x8x256xf32> to vector<8x256xf32>
    %c0_140 = arith.constant 0 : index
    %c0_141 = arith.constant 0 : index
    %242 = vector.load %arg8[%c0_140, %c0_141] : memref<8x128xf32, #tpu.memory_space<vmem>>, vector<8x128xf32>
    %cst_142 = arith.constant dense<0.000000e+00> : vector<8x256xf32>
    %243 = tpu.matmul %242, %0, %cst_142 {dimension_numbers = #tpu.dot_dimension_numbers<[1], [0], [0], [1], [0, 0, 1, 1], [], []>} : vector<8x128xf32>, vector<128x256xf32>, vector<8x256xf32> -> vector<8x256xf32>
    %244 = arith.addf %241, %243 : vector<8x256xf32>
    %c0_143 = arith.constant 0 : index
    %c0_144 = arith.constant 0 : index
    %245 = vector.load %arg9[%c0_143, %c0_144] : memref<8x128xf32, #tpu.memory_space<vmem>>, vector<8x128xf32>
    %246 = arith.mulf %244, %13 : vector<8x256xf32>
    %247 = math.tanh %246 : vector<8x256xf32>
    %248 = arith.mulf %247, %13 : vector<8x256xf32>
    %249 = arith.addf %248, %16 : vector<8x256xf32>
    %250 = vector.extract_strided_slice %249 {offsets = [0, 0], sizes = [8, 128], strides = [1, 1]} : vector<8x256xf32> to vector<8x128xf32>
    %251 = vector.extract_strided_slice %249 {offsets = [0, 128], sizes = [8, 128], strides = [1, 1]} : vector<8x256xf32> to vector<8x128xf32>
    %252 = arith.select %19, %251, %245 : vector<8x128xi1>, vector<8x128xf32>
    %253 = arith.mulf %250, %252 : vector<8x128xf32>
    %c64_i32_145 = arith.constant 64 : i32
    %254 = tpu.dynamic_rotate %253 by %c64_i32_145 dim 1 : vector<8x128xf32>, i32 -> vector<8x128xf32>
    %255 = arith.addf %253, %254 : vector<8x128xf32>
    %256 = math.tanh %255 : vector<8x128xf32>
    %257 = arith.mulf %251, %256 : vector<8x128xf32>
    %c64_i32_146 = arith.constant 64 : i32
    %258 = tpu.dynamic_rotate %257 by %c64_i32_146 dim 1 : vector<8x128xf32>, i32 -> vector<8x128xf32>
    %259 = arith.select %19, %258, %257 : vector<8x128xi1>, vector<8x128xf32>
    %c0_147 = arith.constant 0 : index
    %c0_148 = arith.constant 0 : index
    %260 = vector.load %arg8[%c0_147, %c0_148] : memref<8x128xf32, #tpu.memory_space<vmem>>, vector<8x128xf32>
    tpu.vector_store %arg8[%c0_147, %c0_148], %259 {strides = array<i32>} : memref<8x128xf32, #tpu.memory_space<vmem>>, vector<8x128xf32>,
    %c0_149 = arith.constant 0 : index
    %c0_150 = arith.constant 0 : index
    %261 = vector.load %arg9[%c0_149, %c0_150] : memref<8x128xf32, #tpu.memory_space<vmem>>, vector<8x128xf32>
    tpu.vector_store %arg9[%c0_149, %c0_150], %255 {strides = array<i32>} : memref<8x128xf32, #tpu.memory_space<vmem>>, vector<8x128xf32>,
    %c0_151 = arith.constant 0 : index
    %c0_152 = arith.constant 0 : index
    %262 = vector.load %arg10[%c0_151, %c0_152] : memref<8x128xf32, #tpu.memory_space<vmem>>, vector<8x128xf32>
    %263 = arith.select %19, %259, %262 : vector<8x128xi1>, vector<8x128xf32>
    %cst_153 = arith.constant dense<0.000000e+00> : vector<8x256xf32>
    %264 = tpu.matmul %263, %1, %cst_153 {dimension_numbers = #tpu.dot_dimension_numbers<[1], [0], [0], [1], [0, 0, 1, 1], [], []>} : vector<8x128xf32>, vector<128x256xf32>, vector<8x256xf32> -> vector<8x256xf32>
    %265 = arith.addf %264, %4 : vector<8x256xf32>
    %c0_154 = arith.constant 0 : index
    %c0_155 = arith.constant 0 : index
    %266 = vector.load %arg11[%c0_154, %c0_155] : memref<8x128xf32, #tpu.memory_space<vmem>>, vector<8x128xf32>
    %267 = arith.mulf %265, %13 : vector<8x256xf32>
    %268 = math.tanh %267 : vector<8x256xf32>
    %269 = arith.mulf %268, %13 : vector<8x256xf32>
    %270 = arith.addf %269, %16 : vector<8x256xf32>
    %271 = vector.extract_strided_slice %270 {offsets = [0, 0], sizes = [8, 128], strides = [1, 1]} : vector<8x256xf32> to vector<8x128xf32>
    %272 = vector.extract_strided_slice %270 {offsets = [0, 128], sizes = [8, 128], strides = [1, 1]} : vector<8x256xf32> to vector<8x128xf32>
    %273 = arith.select %19, %272, %266 : vector<8x128xi1>, vector<8x128xf32>
    %274 = arith.mulf %271, %273 : vector<8x128xf32>
    %c64_i32_156 = arith.constant 64 : i32
    %275 = tpu.dynamic_rotate %274 by %c64_i32_156 dim 1 : vector<8x128xf32>, i32 -> vector<8x128xf32>
    %276 = arith.addf %274, %275 : vector<8x128xf32>
    %277 = math.tanh %276 : vector<8x128xf32>
    %278 = arith.mulf %272, %277 : vector<8x128xf32>
    %c64_i32_157 = arith.constant 64 : i32
    %279 = tpu.dynamic_rotate %278 by %c64_i32_157 dim 1 : vector<8x128xf32>, i32 -> vector<8x128xf32>
    %280 = arith.select %19, %279, %278 : vector<8x128xi1>, vector<8x128xf32>
    %c0_158 = arith.constant 0 : index
    %c0_159 = arith.constant 0 : index
    %281 = vector.load %arg10[%c0_158, %c0_159] : memref<8x128xf32, #tpu.memory_space<vmem>>, vector<8x128xf32>
    tpu.vector_store %arg10[%c0_158, %c0_159], %280 {strides = array<i32>} : memref<8x128xf32, #tpu.memory_space<vmem>>, vector<8x128xf32>,
    %c0_160 = arith.constant 0 : index
    %c0_161 = arith.constant 0 : index
    %282 = vector.load %arg11[%c0_160, %c0_161] : memref<8x128xf32, #tpu.memory_space<vmem>>, vector<8x128xf32>
    tpu.vector_store %arg11[%c0_160, %c0_161], %276 {strides = array<i32>} : memref<8x128xf32, #tpu.memory_space<vmem>>, vector<8x128xf32>,
    %c6 = arith.constant 6 : index
    %c0_162 = arith.constant 0 : index
    %c0_163 = arith.constant 0 : index
    %283 = vector.load %arg1[%c6, %c0_162, %c0_163] : memref<8x8x256xf32, #tpu.memory_space<vmem>>, vector<1x8x256xf32>
    %284 = vector.shape_cast %283 : vector<1x8x256xf32> to vector<8x256xf32>
    %c0_164 = arith.constant 0 : index
    %c0_165 = arith.constant 0 : index
    %285 = vector.load %arg8[%c0_164, %c0_165] : memref<8x128xf32, #tpu.memory_space<vmem>>, vector<8x128xf32>
    %cst_166 = arith.constant dense<0.000000e+00> : vector<8x256xf32>
    %286 = tpu.matmul %285, %0, %cst_166 {dimension_numbers = #tpu.dot_dimension_numbers<[1], [0], [0], [1], [0, 0, 1, 1], [], []>} : vector<8x128xf32>, vector<128x256xf32>, vector<8x256xf32> -> vector<8x256xf32>
    %287 = arith.addf %284, %286 : vector<8x256xf32>
    %c0_167 = arith.constant 0 : index
    %c0_168 = arith.constant 0 : index
    %288 = vector.load %arg9[%c0_167, %c0_168] : memref<8x128xf32, #tpu.memory_space<vmem>>, vector<8x128xf32>
    %289 = arith.mulf %287, %13 : vector<8x256xf32>
    %290 = math.tanh %289 : vector<8x256xf32>
    %291 = arith.mulf %290, %13 : vector<8x256xf32>
    %292 = arith.addf %291, %16 : vector<8x256xf32>
    %293 = vector.extract_strided_slice %292 {offsets = [0, 0], sizes = [8, 128], strides = [1, 1]} : vector<8x256xf32> to vector<8x128xf32>
    %294 = vector.extract_strided_slice %292 {offsets = [0, 128], sizes = [8, 128], strides = [1, 1]} : vector<8x256xf32> to vector<8x128xf32>
    %295 = arith.select %19, %294, %288 : vector<8x128xi1>, vector<8x128xf32>
    %296 = arith.mulf %293, %295 : vector<8x128xf32>
    %c64_i32_169 = arith.constant 64 : i32
    %297 = tpu.dynamic_rotate %296 by %c64_i32_169 dim 1 : vector<8x128xf32>, i32 -> vector<8x128xf32>
    %298 = arith.addf %296, %297 : vector<8x128xf32>
    %299 = math.tanh %298 : vector<8x128xf32>
    %300 = arith.mulf %294, %299 : vector<8x128xf32>
    %c64_i32_170 = arith.constant 64 : i32
    %301 = tpu.dynamic_rotate %300 by %c64_i32_170 dim 1 : vector<8x128xf32>, i32 -> vector<8x128xf32>
    %302 = arith.select %19, %301, %300 : vector<8x128xi1>, vector<8x128xf32>
    %c0_171 = arith.constant 0 : index
    %c0_172 = arith.constant 0 : index
    %303 = vector.load %arg8[%c0_171, %c0_172] : memref<8x128xf32, #tpu.memory_space<vmem>>, vector<8x128xf32>
    tpu.vector_store %arg8[%c0_171, %c0_172], %302 {strides = array<i32>} : memref<8x128xf32, #tpu.memory_space<vmem>>, vector<8x128xf32>,
    %c0_173 = arith.constant 0 : index
    %c0_174 = arith.constant 0 : index
    %304 = vector.load %arg9[%c0_173, %c0_174] : memref<8x128xf32, #tpu.memory_space<vmem>>, vector<8x128xf32>
    tpu.vector_store %arg9[%c0_173, %c0_174], %298 {strides = array<i32>} : memref<8x128xf32, #tpu.memory_space<vmem>>, vector<8x128xf32>,
    %c0_175 = arith.constant 0 : index
    %c0_176 = arith.constant 0 : index
    %305 = vector.load %arg10[%c0_175, %c0_176] : memref<8x128xf32, #tpu.memory_space<vmem>>, vector<8x128xf32>
    %306 = arith.select %19, %302, %305 : vector<8x128xi1>, vector<8x128xf32>
    %cst_177 = arith.constant dense<0.000000e+00> : vector<8x256xf32>
    %307 = tpu.matmul %306, %1, %cst_177 {dimension_numbers = #tpu.dot_dimension_numbers<[1], [0], [0], [1], [0, 0, 1, 1], [], []>} : vector<8x128xf32>, vector<128x256xf32>, vector<8x256xf32> -> vector<8x256xf32>
    %308 = arith.addf %307, %4 : vector<8x256xf32>
    %c0_178 = arith.constant 0 : index
    %c0_179 = arith.constant 0 : index
    %309 = vector.load %arg11[%c0_178, %c0_179] : memref<8x128xf32, #tpu.memory_space<vmem>>, vector<8x128xf32>
    %310 = arith.mulf %308, %13 : vector<8x256xf32>
    %311 = math.tanh %310 : vector<8x256xf32>
    %312 = arith.mulf %311, %13 : vector<8x256xf32>
    %313 = arith.addf %312, %16 : vector<8x256xf32>
    %314 = vector.extract_strided_slice %313 {offsets = [0, 0], sizes = [8, 128], strides = [1, 1]} : vector<8x256xf32> to vector<8x128xf32>
    %315 = vector.extract_strided_slice %313 {offsets = [0, 128], sizes = [8, 128], strides = [1, 1]} : vector<8x256xf32> to vector<8x128xf32>
    %316 = arith.select %19, %315, %309 : vector<8x128xi1>, vector<8x128xf32>
    %317 = arith.mulf %314, %316 : vector<8x128xf32>
    %c64_i32_180 = arith.constant 64 : i32
    %318 = tpu.dynamic_rotate %317 by %c64_i32_180 dim 1 : vector<8x128xf32>, i32 -> vector<8x128xf32>
    %319 = arith.addf %317, %318 : vector<8x128xf32>
    %320 = math.tanh %319 : vector<8x128xf32>
    %321 = arith.mulf %315, %320 : vector<8x128xf32>
    %c64_i32_181 = arith.constant 64 : i32
    %322 = tpu.dynamic_rotate %321 by %c64_i32_181 dim 1 : vector<8x128xf32>, i32 -> vector<8x128xf32>
    %323 = arith.select %19, %322, %321 : vector<8x128xi1>, vector<8x128xf32>
    %c0_182 = arith.constant 0 : index
    %c0_183 = arith.constant 0 : index
    %324 = vector.load %arg10[%c0_182, %c0_183] : memref<8x128xf32, #tpu.memory_space<vmem>>, vector<8x128xf32>
    tpu.vector_store %arg10[%c0_182, %c0_183], %323 {strides = array<i32>} : memref<8x128xf32, #tpu.memory_space<vmem>>, vector<8x128xf32>,
    %c0_184 = arith.constant 0 : index
    %c0_185 = arith.constant 0 : index
    %325 = vector.load %arg11[%c0_184, %c0_185] : memref<8x128xf32, #tpu.memory_space<vmem>>, vector<8x128xf32>
    tpu.vector_store %arg11[%c0_184, %c0_185], %319 {strides = array<i32>} : memref<8x128xf32, #tpu.memory_space<vmem>>, vector<8x128xf32>,
    %c7 = arith.constant 7 : index
    %c0_186 = arith.constant 0 : index
    %c0_187 = arith.constant 0 : index
    %326 = vector.load %arg1[%c7, %c0_186, %c0_187] : memref<8x8x256xf32, #tpu.memory_space<vmem>>, vector<1x8x256xf32>
    %327 = vector.shape_cast %326 : vector<1x8x256xf32> to vector<8x256xf32>
    %c0_188 = arith.constant 0 : index
    %c0_189 = arith.constant 0 : index
    %328 = vector.load %arg8[%c0_188, %c0_189] : memref<8x128xf32, #tpu.memory_space<vmem>>, vector<8x128xf32>
    %cst_190 = arith.constant dense<0.000000e+00> : vector<8x256xf32>
    %329 = tpu.matmul %328, %0, %cst_190 {dimension_numbers = #tpu.dot_dimension_numbers<[1], [0], [0], [1], [0, 0, 1, 1], [], []>} : vector<8x128xf32>, vector<128x256xf32>, vector<8x256xf32> -> vector<8x256xf32>
    %330 = arith.addf %327, %329 : vector<8x256xf32>
    %c0_191 = arith.constant 0 : index
    %c0_192 = arith.constant 0 : index
    %331 = vector.load %arg9[%c0_191, %c0_192] : memref<8x128xf32, #tpu.memory_space<vmem>>, vector<8x128xf32>
    %332 = arith.mulf %330, %13 : vector<8x256xf32>
    %333 = math.tanh %332 : vector<8x256xf32>
    %334 = arith.mulf %333, %13 : vector<8x256xf32>
    %335 = arith.addf %334, %16 : vector<8x256xf32>
    %336 = vector.extract_strided_slice %335 {offsets = [0, 0], sizes = [8, 128], strides = [1, 1]} : vector<8x256xf32> to vector<8x128xf32>
    %337 = vector.extract_strided_slice %335 {offsets = [0, 128], sizes = [8, 128], strides = [1, 1]} : vector<8x256xf32> to vector<8x128xf32>
    %338 = arith.select %19, %337, %331 : vector<8x128xi1>, vector<8x128xf32>
    %339 = arith.mulf %336, %338 : vector<8x128xf32>
    %c64_i32_193 = arith.constant 64 : i32
    %340 = tpu.dynamic_rotate %339 by %c64_i32_193 dim 1 : vector<8x128xf32>, i32 -> vector<8x128xf32>
    %341 = arith.addf %339, %340 : vector<8x128xf32>
    %342 = math.tanh %341 : vector<8x128xf32>
    %343 = arith.mulf %337, %342 : vector<8x128xf32>
    %c64_i32_194 = arith.constant 64 : i32
    %344 = tpu.dynamic_rotate %343 by %c64_i32_194 dim 1 : vector<8x128xf32>, i32 -> vector<8x128xf32>
    %345 = arith.select %19, %344, %343 : vector<8x128xi1>, vector<8x128xf32>
    %c0_195 = arith.constant 0 : index
    %c0_196 = arith.constant 0 : index
    %346 = vector.load %arg8[%c0_195, %c0_196] : memref<8x128xf32, #tpu.memory_space<vmem>>, vector<8x128xf32>
    tpu.vector_store %arg8[%c0_195, %c0_196], %345 {strides = array<i32>} : memref<8x128xf32, #tpu.memory_space<vmem>>, vector<8x128xf32>,
    %c0_197 = arith.constant 0 : index
    %c0_198 = arith.constant 0 : index
    %347 = vector.load %arg9[%c0_197, %c0_198] : memref<8x128xf32, #tpu.memory_space<vmem>>, vector<8x128xf32>
    tpu.vector_store %arg9[%c0_197, %c0_198], %341 {strides = array<i32>} : memref<8x128xf32, #tpu.memory_space<vmem>>, vector<8x128xf32>,
    %c0_199 = arith.constant 0 : index
    %c0_200 = arith.constant 0 : index
    %348 = vector.load %arg10[%c0_199, %c0_200] : memref<8x128xf32, #tpu.memory_space<vmem>>, vector<8x128xf32>
    %349 = arith.select %19, %345, %348 : vector<8x128xi1>, vector<8x128xf32>
    %cst_201 = arith.constant dense<0.000000e+00> : vector<8x256xf32>
    %350 = tpu.matmul %349, %1, %cst_201 {dimension_numbers = #tpu.dot_dimension_numbers<[1], [0], [0], [1], [0, 0, 1, 1], [], []>} : vector<8x128xf32>, vector<128x256xf32>, vector<8x256xf32> -> vector<8x256xf32>
    %351 = arith.addf %350, %4 : vector<8x256xf32>
    %c0_202 = arith.constant 0 : index
    %c0_203 = arith.constant 0 : index
    %352 = vector.load %arg11[%c0_202, %c0_203] : memref<8x128xf32, #tpu.memory_space<vmem>>, vector<8x128xf32>
    %353 = arith.mulf %351, %13 : vector<8x256xf32>
    %354 = math.tanh %353 : vector<8x256xf32>
    %355 = arith.mulf %354, %13 : vector<8x256xf32>
    %356 = arith.addf %355, %16 : vector<8x256xf32>
    %357 = vector.extract_strided_slice %356 {offsets = [0, 0], sizes = [8, 128], strides = [1, 1]} : vector<8x256xf32> to vector<8x128xf32>
    %358 = vector.extract_strided_slice %356 {offsets = [0, 128], sizes = [8, 128], strides = [1, 1]} : vector<8x256xf32> to vector<8x128xf32>
    %359 = arith.select %19, %358, %352 : vector<8x128xi1>, vector<8x128xf32>
    %360 = arith.mulf %357, %359 : vector<8x128xf32>
    %c64_i32_204 = arith.constant 64 : i32
    %361 = tpu.dynamic_rotate %360 by %c64_i32_204 dim 1 : vector<8x128xf32>, i32 -> vector<8x128xf32>
    %362 = arith.addf %360, %361 : vector<8x128xf32>
    %363 = math.tanh %362 : vector<8x128xf32>
    %364 = arith.mulf %358, %363 : vector<8x128xf32>
    %c64_i32_205 = arith.constant 64 : i32
    %365 = tpu.dynamic_rotate %364 by %c64_i32_205 dim 1 : vector<8x128xf32>, i32 -> vector<8x128xf32>
    %366 = arith.select %19, %365, %364 : vector<8x128xi1>, vector<8x128xf32>
    %c0_206 = arith.constant 0 : index
    %c0_207 = arith.constant 0 : index
    %367 = vector.load %arg10[%c0_206, %c0_207] : memref<8x128xf32, #tpu.memory_space<vmem>>, vector<8x128xf32>
    tpu.vector_store %arg10[%c0_206, %c0_207], %366 {strides = array<i32>} : memref<8x128xf32, #tpu.memory_space<vmem>>, vector<8x128xf32>,
    %c0_208 = arith.constant 0 : index
    %c0_209 = arith.constant 0 : index
    %368 = vector.load %arg11[%c0_208, %c0_209] : memref<8x128xf32, #tpu.memory_space<vmem>>, vector<8x128xf32>
    tpu.vector_store %arg11[%c0_208, %c0_209], %362 {strides = array<i32>} : memref<8x128xf32, #tpu.memory_space<vmem>>, vector<8x128xf32>,
    %c0_210 = arith.constant 0 : index
    %c0_211 = arith.constant 0 : index
    %369 = vector.load %arg10[%c0_210, %c0_211] : memref<8x128xf32, #tpu.memory_space<vmem>>, vector<8x128xf32>
    %c0_212 = arith.constant 0 : index
    %c0_213 = arith.constant 0 : index
    %370 = vector.load %arg5[%c0_212, %c0_213] : memref<128x128xf32, #tpu.memory_space<vmem>>, vector<128x128xf32>
    %cst_214 = arith.constant dense<0.000000e+00> : vector<8x128xf32>
    %371 = tpu.matmul %369, %370, %cst_214 {dimension_numbers = #tpu.dot_dimension_numbers<[1], [0], [0], [1], [0, 0, 1, 1], [], []>} : vector<8x128xf32>, vector<128x128xf32>, vector<8x128xf32> -> vector<8x128xf32>
    %c0_215 = arith.constant 0 : index
    %c0_216 = arith.constant 0 : index
    %372 = vector.load %arg6[%c0_215, %c0_216] : memref<1x128xf32, #tpu.memory_space<vmem>>, vector<1x128xf32>
    %373 = vector.broadcast %372 : vector<1x128xf32> to vector<8x128xf32>
    %374 = arith.addf %371, %373 : vector<8x128xf32>
    %c0_217 = arith.constant 0 : index
    %c0_218 = arith.constant 0 : index
    %375 = vector.load %arg7[%c0_217, %c0_218] : memref<8x128xf32, #tpu.memory_space<vmem>>, vector<8x128xf32>
    tpu.vector_store %arg7[%c0_217, %c0_218], %374 {strides = array<i32>} : memref<8x128xf32, #tpu.memory_space<vmem>>, vector<8x128xf32>,
    return
  }
  func.func @transform_0(%arg0: i32) -> (i32, i32, i32) {
    %c0_i32 = arith.constant 0 : i32
    %c0_i32_0 = arith.constant 0 : i32
    %c0_i32_1 = arith.constant 0 : i32
    return %c0_i32, %arg0, %c0_i32_0 : i32, i32, i32
  }
  func.func @transform_1(%arg0: i32) -> (i32, i32) {
    %c0_i32 = arith.constant 0 : i32
    %c0_i32_0 = arith.constant 0 : i32
    %c0_i32_1 = arith.constant 0 : i32
    return %c0_i32, %c0_i32_0 : i32, i32
  }
  func.func @transform_2(%arg0: i32) -> (i32, i32) {
    %c0_i32 = arith.constant 0 : i32
    %c0_i32_0 = arith.constant 0 : i32
    %c0_i32_1 = arith.constant 0 : i32
    return %c0_i32, %c0_i32_0 : i32, i32
  }
  func.func @transform_3(%arg0: i32) -> (i32, i32) {
    %c0_i32 = arith.constant 0 : i32
    %c0_i32_0 = arith.constant 0 : i32
    %c0_i32_1 = arith.constant 0 : i32
    return %c0_i32, %c0_i32_0 : i32, i32
  }
  func.func @transform_4(%arg0: i32) -> (i32, i32) {
    %c0_i32 = arith.constant 0 : i32
    %c0_i32_0 = arith.constant 0 : i32
    %c0_i32_1 = arith.constant 0 : i32
    return %c0_i32, %c0_i32_0 : i32, i32
  }
  func.func @transform_5(%arg0: i32) -> (i32, i32) {
    %c0_i32 = arith.constant 0 : i32
    %c0_i32_0 = arith.constant 0 : i32
    %c0_i32_1 = arith.constant 0 : i32
    return %c0_i32, %c0_i32_0 : i32, i32
  }
  func.func @transform_6(%arg0: i32) -> (i32, i32) {
    %c0_i32 = arith.constant 0 : i32
    %c0_i32_0 = arith.constant 0 : i32
    return %arg0, %c0_i32 : i32, i32
  }
}

</mosaic_0001>

<llo_original>
// kernel: tpu_custom_call.1
$region0: #{tpu_custom_call.1}
  #allocation0 [shape = 'u32[]', space=smem, size = 0x4, offset = 0x4, fixed_abs, tag = 'smem constant byte address 0x4 - core index']
  #allocation1 [shape = 'u32[72,128]{1,0:T(1,128)}', space=vmem, size = 0x9000, scoped, tag = 'internal scratch']
  #allocation2 [shape = 'f32[8,128]{1,0:T(8,128)}', space=vmem, size = 0x1000, scoped, tag = 'scratch operand']
  #allocation3 [shape = 'f32[8,128]{1,0:T(8,128)}', space=vmem, size = 0x1000, scoped, tag = 'scratch operand']
  #allocation4 [shape = 'f32[8,128]{1,0:T(8,128)}', space=vmem, size = 0x1000, scoped, tag = 'scratch operand']
  #allocation5 [shape = 'f32[8,128]{1,0:T(8,128)}', space=vmem, size = 0x1000, scoped, tag = 'scratch operand']
  %s0 = inlined_call_operand.hbm [shape: f32[8,8,256], index: 0, kind: input, shape index: {}]
  %s1 = inlined_call_operand.hbm [shape: f32[128,256], index: 1, kind: input, shape index: {}]
  %s2 = inlined_call_operand.hbm [shape: f32[128,256], index: 2, kind: input, shape index: {}]
  %s3 = inlined_call_operand.vmem [shape: f32[1,256], index: 3, kind: input, shape index: {}]
  %s4 = inlined_call_operand.hbm [shape: f32[128,128], index: 4, kind: input, shape index: {}]
  %s5 = inlined_call_operand.vmem [shape: f32[1,128], index: 5, kind: input, shape index: {}]
  %s6 = inlined_call_operand.hbm [shape: f32[8,128], index: 6, kind: output, shape index: {}]
  %s7 = sld [smem:[#allocation0]]
  $region50: #{tpu_custom_call.1} parent=0
    _
  %s9 = ssub.s32 1, %s7
  %s10 = scalar_select 0, %s9, %s7
  $region1: #{tpu_custom_call.1} parent=0
    #allocation6 [shape = 'u8[65536]{0}', space=vmem, size = 0x10000, scoped, tag = 'input window, operand 0, single buffered']
    #allocation7 [shape = 's32[1]{0}', space=sflag, size = 0x4, scoped, tag = 'scoped memory for tpu_custom_call.1']
    #allocation8 [shape = 's32[1]{0}', space=sflag, size = 0x4, scoped, tag = 'scoped memory for tpu_custom_call.1']
    #allocation9 [shape = 'u8[131072]{0}', space=vmem, size = 0x20000, scoped, tag = 'input window, operand 1, single buffered']
    #allocation10 [shape = 's32[1]{0}', space=sflag, size = 0x4, scoped, tag = 'scoped memory for tpu_custom_call.1']
    #allocation11 [shape = 'u8[131072]{0}', space=vmem, size = 0x20000, scoped, tag = 'input window, operand 2, single buffered']
    #allocation12 [shape = 'u8[65536]{0}', space=vmem, size = 0x10000, scoped, tag = 'input window, operand 4, single buffered']
    #allocation13 [shape = 's32[1]{0}', space=sflag, size = 0x4, scoped, tag = 'scoped memory for tpu_custom_call.1']
    #allocation14 [shape = 'u8[4096]{0}', space=vmem, size = 0x1000, scoped, tag = 'output window, operand 0, single buffered']
    %11 = vsyncpa [#allocation7], 0
    %12 = vsyncpa [#allocation10], 0
    %13 = vsyncpa [#allocation13], 0
    %14 = vsyncpa [#allocation8], 0
    // Predicated region
    $region2: #{tpu_custom_call.1} parent=1 // pred_check
      _
    $region3: #{tpu_custom_call.1} parent=1 // pred_check_branch
      %16 = sbr.rel (0) target = $region5
    $region4: #{tpu_custom_call.1} parent=1 // pred_region
      %18 = vsyncadd [#allocation7], 0
      %s19 = sshll.u32 %s0, 4
      %s20 = int_to_ptr.hbm [resolvable:$true] %s19
      %s21 = sshll.u32 [#allocation6], 4
      %s22 = int_to_ptr.vmem [resolvable:$true] %s21
      %27 = dma.hbm_to_vmem [thread:$0]  %s20, 2048, %s22, [#allocation7], 256, 256, 16
    $region5: #{tpu_custom_call.1} parent=1 // pred_fallthru
      _
    // Predicated region
    $region6: #{tpu_custom_call.1} parent=1 // pred_check
      _
    $region7: #{tpu_custom_call.1} parent=1 // pred_check_branch
      %29 = sbr.rel (0) target = $region9
    $region8: #{tpu_custom_call.1} parent=1 // pred_region
      %31 = vsyncadd [#allocation10], 0
      %s32 = sshll.u32 %s1, 4
      %s33 = int_to_ptr.hbm [resolvable:$true] %s32
      %s34 = sshll.u32 [#allocation9], 4
      %s35 = int_to_ptr.vmem [resolvable:$true] %s34
      %40 = dma.hbm_to_vmem [thread:$0]  %s33, 4096, %s35, [#allocation10], 256, 256, 16
    $region9: #{tpu_custom_call.1} parent=1 // pred_fallthru
      _
    // Predicated region
    $region10: #{tpu_custom_call.1} parent=1 // pred_check
      _
    $region11: #{tpu_custom_call.1} parent=1 // pred_check_branch
      %42 = sbr.rel (0) target = $region13
    $region12: #{tpu_custom_call.1} parent=1 // pred_region
      %44 = vsyncadd [#allocation10], 0
      %s45 = sshll.u32 %s2, 4
      %s46 = int_to_ptr.hbm [resolvable:$true] %s45
      %s47 = sshll.u32 [#allocation11], 4
      %s48 = int_to_ptr.vmem [resolvable:$true] %s47
      %53 = dma.hbm_to_vmem [thread:$0]  %s46, 4096, %s48, [#allocation10], 256, 256, 16
    $region13: #{tpu_custom_call.1} parent=1 // pred_fallthru
      _
    // Predicated region
    $region14: #{tpu_custom_call.1} parent=1 // pred_check
      _
    $region15: #{tpu_custom_call.1} parent=1 // pred_check_branch
      %55 = sbr.rel (0) target = $region17
    $region16: #{tpu_custom_call.1} parent=1 // pred_region
      _
    $region17: #{tpu_custom_call.1} parent=1 // pred_fallthru
      _
    // Predicated region
    $region18: #{tpu_custom_call.1} parent=1 // pred_check
      _
    $region19: #{tpu_custom_call.1} parent=1 // pred_check_branch
      %57 = sbr.rel (0) target = $region21
    $region20: #{tpu_custom_call.1} parent=1 // pred_region
      %59 = vsyncadd [#allocation13], 0
      %s60 = sshll.u32 %s4, 4
      %s61 = int_to_ptr.hbm [resolvable:$true] %s60
      %s62 = sshll.u32 [#allocation12], 4
      %s63 = int_to_ptr.vmem [resolvable:$true] %s62
      %68 = dma.hbm_to_vmem [thread:$0]  %s61, 2048, %s63, [#allocation13], 128, 128, 8
    $region21: #{tpu_custom_call.1} parent=1 // pred_fallthru
      _
    // Predicated region
    $region22: #{tpu_custom_call.1} parent=1 // pred_check
      _
    $region23: #{tpu_custom_call.1} parent=1 // pred_check_branch
      %70 = sbr.rel (0) target = $region25
    $region24: #{tpu_custom_call.1} parent=1 // pred_region
      _
    $region25: #{tpu_custom_call.1} parent=1 // pred_fallthru
      _
    // Predicated region
    $region26: #{tpu_custom_call.1} parent=1 // pred_check
      _
    $region27: #{tpu_custom_call.1} parent=1 // pred_check_branch
      %72 = sbr.rel (0) target = $region29
    $region28: #{tpu_custom_call.1} parent=1 // pred_region
      %74 = dma.done [#allocation7], 2048
    $region29: #{tpu_custom_call.1} parent=1 // pred_fallthru
      _
    // Predicated region
    $region30: #{tpu_custom_call.1} parent=1 // pred_check
      _
    $region31: #{tpu_custom_call.1} parent=1 // pred_check_branch
      %76 = sbr.rel (0) target = $region33
    $region32: #{tpu_custom_call.1} parent=1 // pred_region
      %78 = dma.done [#allocation10], 4096
    $region33: #{tpu_custom_call.1} parent=1 // pred_fallthru
      _
    // Predicated region
    $region34: #{tpu_custom_call.1} parent=1 // pred_check
      _
    $region35: #{tpu_custom_call.1} parent=1 // pred_check_branch
      %80 = sbr.rel (0) target = $region37
    $region36: #{tpu_custom_call.1} parent=1 // pred_region
      %82 = dma.done [#allocation10], 4096
    $region37: #{tpu_custom_call.1} parent=1 // pred_fallthru
      _
    // Predicated region
    $region38: #{tpu_custom_call.1} parent=1 // pred_check
      _
    $region39: #{tpu_custom_call.1} parent=1 // pred_check_branch
      %84 = sbr.rel (0) target = $region41
    $region40: #{tpu_custom_call.1} parent=1 // pred_region
      %86 = dma.done [#allocation13], 2048
    $region41: #{tpu_custom_call.1} parent=1 // pred_fallthru
      _
    %v87 = vld [vmem:[#allocation9] sm:$0xff]
    %v88 = vld [vmem:[#allocation9 + $0x8] sm:$0xff]
    %v89 = vld [vmem:[#allocation9 + $0x10] sm:$0xff]
    %v90 = vld [vmem:[#allocation9 + $0x18] sm:$0xff]
    %v91 = vld [vmem:[#allocation9 + $0x20] sm:$0xff]
    %v92 = vld [vmem:[#allocation9 + $0x28] sm:$0xff]
    %v93 = vld [vmem:[#allocation9 + $0x30] sm:$0xff]
    %v94 = vld [vmem:[#allocation9 + $0x38] sm:$0xff]
    %v95 = vld [vmem:[#allocation9 + $0x40] sm:$0xff]
    %v96 = vld [vmem:[#allocation9 + $0x48] sm:$0xff]
    %v97 = vld [vmem:[#allocation9 + $0x50] sm:$0xff]
    %v98 = vld [vmem:[#allocation9 + $0x58] sm:$0xff]
    %v99 = vld [vmem:[#allocation9 + $0x60] sm:$0xff]
    %v100 = vld [vmem:[#allocation9 + $0x68] sm:$0xff]
    %v101 = vld [vmem:[#allocation9 + $0x70] sm:$0xff]
    %v102 = vld [vmem:[#allocation9 + $0x78] sm:$0xff]
    %v103 = vld [vmem:[#allocation9 + $0x80] sm:$0xff]
    %v104 = vld [vmem:[#allocation9 + $0x88] sm:$0xff]
    %v105 = vld [vmem:[#allocation9 + $0x90] sm:$0xff]
    %v106 = vld [vmem:[#allocation9 + $0x98] sm:$0xff]
    %v107 = vld [vmem:[#allocation9 + $0xa0] sm:$0xff]
    %v108 = vld [vmem:[#allocation9 + $0xa8] sm:$0xff]
    %v109 = vld [vmem:[#allocation9 + $0xb0] sm:$0xff]
    %v110 = vld [vmem:[#allocation9 + $0xb8] sm:$0xff]
    %v111 = vld [vmem:[#allocation9 + $0xc0] sm:$0xff]
    %v112 = vld [vmem:[#allocation9 + $0xc8] sm:$0xff]
    %v113 = vld [vmem:[#allocation9 + $0xd0] sm:$0xff]
    %v114 = vld [vmem:[#allocation9 + $0xd8] sm:$0xff]
    %v115 = vld [vmem:[#allocation9 + $0xe0] sm:$0xff]
    %v116 = vld [vmem:[#allocation9 + $0xe8] sm:$0xff]
    %v117 = vld [vmem:[#allocation9 + $0xf0] sm:$0xff]
    %v118 = vld [vmem:[#allocation9 + $0xf8] sm:$0xff]
    %v119 = vld [vmem:[#allocation11] sm:$0xff]
    %v120 = vld [vmem:[#allocation11 + $0x8] sm:$0xff]
    %v121 = vld [vmem:[#allocation11 + $0x10] sm:$0xff]
    %v122 = vld [vmem:[#allocation11 + $0x18] sm:$0xff]
    %v123 = vld [vmem:[#allocation11 + $0x20] sm:$0xff]
    %v124 = vld [vmem:[#allocation11 + $0x28] sm:$0xff]
    %v125 = vld [vmem:[#allocation11 + $0x30] sm:$0xff]
    %v126 = vld [vmem:[#allocation11 + $0x38] sm:$0xff]
    %v127 = vld [vmem:[#allocation11 + $0x40] sm:$0xff]
    %v128 = vld [vmem:[#allocation11 + $0x48] sm:$0xff]
    %v129 = vld [vmem:[#allocation11 + $0x50] sm:$0xff]
    %v130 = vld [vmem:[#allocation11 + $0x58] sm:$0xff]
    %v131 = vld [vmem:[#allocation11 + $0x60] sm:$0xff]
    %v132 = vld [vmem:[#allocation11 + $0x68] sm:$0xff]
    %v133 = vld [vmem:[#allocation11 + $0x70] sm:$0xff]
    %v134 = vld [vmem:[#allocation11 + $0x78] sm:$0xff]
    %v135 = vld [vmem:[#allocation11 + $0x80] sm:$0xff]
    %v136 = vld [vmem:[#allocation11 + $0x88] sm:$0xff]
    %v137 = vld [vmem:[#allocation11 + $0x90] sm:$0xff]
    %v138 = vld [vmem:[#allocation11 + $0x98] sm:$0xff]
    %v139 = vld [vmem:[#allocation11 + $0xa0] sm:$0xff]
    %v140 = vld [vmem:[#allocation11 + $0xa8] sm:$0xff]
    %v141 = vld [vmem:[#allocation11 + $0xb0] sm:$0xff]
    %v142 = vld [vmem:[#allocation11 + $0xb8] sm:$0xff]
    %v143 = vld [vmem:[#allocation11 + $0xc0] sm:$0xff]
    %v144 = vld [vmem:[#allocation11 + $0xc8] sm:$0xff]
    %v145 = vld [vmem:[#allocation11 + $0xd0] sm:$0xff]
    %v146 = vld [vmem:[#allocation11 + $0xd8] sm:$0xff]
    %v147 = vld [vmem:[#allocation11 + $0xe0] sm:$0xff]
    %v148 = vld [vmem:[#allocation11 + $0xe8] sm:$0xff]
    %v149 = vld [vmem:[#allocation11 + $0xf0] sm:$0xff]
    %v150 = vld [vmem:[#allocation11 + $0xf8] sm:$0xff]
    %v151 = vld [vmem:[%s3] sm:$0x3]
    %v153 = vperm.slane %v151, 0
    %v154 = vperm.slane %v151, 1
    %v157 = vlaneseq
    %v158 = vand.u32 %v157, 127
    %v159 = vadd.s32 %v158, 128
    %vm160 = vcmp.ge.s32.totalorder %v158, 128
    %vm161 = vcmp.ge.s32.totalorder %v159, 128
    %vm162 = vcmp.lt.s32.totalorder %v158, 192
    %vm163 = vcmp.lt.s32.totalorder %v159, 192
    %vm164 = vmand %vm160, %vm162
    %vm165 = vmand %vm161, %vm163
    %v166 = vsel %vm164, 1.0, 0.5
    %v167 = vsel %vm165, 1.0, 0.5
    %v168 = vsel %vm164, 0.0, 0.5
    %v169 = vsel %vm165, 0.0, 0.5
    %vm170 = vcmp.lt.s32.totalorder %v158, 64
    %171 = vst [vmem:[#allocation2] sm:$0xff] 0.0
    %172 = vst [vmem:[#allocation3] sm:$0xff] 0.0
    %173 = vst [vmem:[#allocation4] sm:$0xff] 0.0
    %174 = vst [vmem:[#allocation5] sm:$0xff] 0.0
    %v175 = vld [vmem:[#allocation6] sm:$0xff]
    %v176 = vld [vmem:[#allocation6 + $0x8] sm:$0xff]
    %v177 = vld [vmem:[#allocation2] sm:$0xff]
    %178 = vmatpush.msra.mxu0 %v117
    %179 = vmatpush.msra.mxu0 %v115
    %180 = vmatpush.msra.mxu0 %v113
    %181 = vmatpush.msra.mxu0 %v111
    %182 = vmatpush.msra.mxu0 %v109
    %183 = vmatpush.msra.mxu0 %v107
    %184 = vmatpush.msra.mxu0 %v105
    %185 = vmatpush.msra.mxu0 %v103
    %186 = vmatpush.msra.mxu0 %v101
    %187 = vmatpush.msra.mxu0 %v99
    %188 = vmatpush.msra.mxu0 %v97
    %189 = vmatpush.msra.mxu0 %v95
    %190 = vmatpush.msra.mxu0 %v93
    %191 = vmatpush.msra.mxu0 %v91
    %192 = vmatpush.msra.mxu0 %v89
    %193 = vmatpush.msra.mxu0 %v87
    %194 = vmatmul.f32.gmra.mxu0 %v177
    %v195 = vpop.f32.mrf.mxu0
    %v196 = vadd.f32 0.0, %v195
    %197 = vdwg.mxu0
    %198 = vmatpush.msra.mxu0 %v118
    %199 = vmatpush.msra.mxu0 %v116
    %200 = vmatpush.msra.mxu0 %v114
    %201 = vmatpush.msra.mxu0 %v112
    %202 = vmatpush.msra.mxu0 %v110
    %203 = vmatpush.msra.mxu0 %v108
    %204 = vmatpush.msra.mxu0 %v106
    %205 = vmatpush.msra.mxu0 %v104
    %206 = vmatpush.msra.mxu0 %v102
    %207 = vmatpush.msra.mxu0 %v100
    %208 = vmatpush.msra.mxu0 %v98
    %209 = vmatpush.msra.mxu0 %v96
    %210 = vmatpush.msra.mxu0 %v94
    %211 = vmatpush.msra.mxu0 %v92
    %212 = vmatpush.msra.mxu0 %v90
    %213 = vmatpush.msra.mxu0 %v88
    %214 = vmatmul.f32.gmra.mxu0 %v177
    %v215 = vpop.f32.mrf.mxu0
    %v216 = vadd.f32 0.0, %v215
    %217 = vdwg.mxu0
    %v218 = vadd.f32 %v175, %v196
    %v219 = vadd.f32 %v176, %v216
    %v220 = vld [vmem:[#allocation3] sm:$0xff]
    %v221 = vmul.f32 %v218, %v166
    %v222 = vmul.f32 %v219, %v167
    %v223 = vtanh.pop %v221
    %v224 = vtanh.pop %v222
    %v225 = vmul.f32 %v223, %v166
    %v226 = vmul.f32 %v224, %v167
    %v227 = vadd.f32 %v225, %v168
    %v228 = vadd.f32 %v226, %v169
    %v229 = vsel %vm170, %v228, %v220
    %v230 = vmul.f32 %v227, %v229
    %231 = vrot.lane.b32.xlu0 %v230, 64
    %v232 = vpop.permute.xlu0 %231
    %v233 = vadd.f32 %v230, %v232
    %v234 = vtanh.pop %v233
    %v235 = vmul.f32 %v228, %v234
    %236 = vrot.lane.b32.xlu0 %v235, 64
    %v237 = vpop.permute.xlu0 %236
    %v238 = vsel %vm170, %v237, %v235
    %239 = vst [vmem:[#allocation2] sm:$0xff] %v238
    %240 = vst [vmem:[#allocation3] sm:$0xff] %v233
    %v241 = vld [vmem:[#allocation4] sm:$0xff]
    %v242 = vsel %vm170, %v237, %v241
    %243 = vmatpush.msra.mxu0 %v149
    %244 = vmatpush.msra.mxu0 %v147
    %245 = vmatpush.msra.mxu0 %v145
    %246 = vmatpush.msra.mxu0 %v143
    %247 = vmatpush.msra.mxu0 %v141
    %248 = vmatpush.msra.mxu0 %v139
    %249 = vmatpush.msra.mxu0 %v137
    %250 = vmatpush.msra.mxu0 %v135
    %251 = vmatpush.msra.mxu0 %v133
    %252 = vmatpush.msra.mxu0 %v131
    %253 = vmatpush.msra.mxu0 %v129
    %254 = vmatpush.msra.mxu0 %v127
    %255 = vmatpush.msra.mxu0 %v125
    %256 = vmatpush.msra.mxu0 %v123
    %257 = vmatpush.msra.mxu0 %v121
    %258 = vmatpush.msra.mxu0 %v119
    %259 = vmatmul.f32.gmra.mxu0 %v242
    %v260 = vpop.f32.mrf.mxu0
    %v261 = vadd.f32 %v153, %v260
    %262 = vdwg.mxu0
    %263 = vmatpush.msra.mxu0 %v150
    %264 = vmatpush.msra.mxu0 %v148
    %265 = vmatpush.msra.mxu0 %v146
    %266 = vmatpush.msra.mxu0 %v144
    %267 = vmatpush.msra.mxu0 %v142
    %268 = vmatpush.msra.mxu0 %v140
    %269 = vmatpush.msra.mxu0 %v138
    %270 = vmatpush.msra.mxu0 %v136
    %271 = vmatpush.msra.mxu0 %v134
    %272 = vmatpush.msra.mxu0 %v132
    %273 = vmatpush.msra.mxu0 %v130
    %274 = vmatpush.msra.mxu0 %v128
    %275 = vmatpush.msra.mxu0 %v126
    %276 = vmatpush.msra.mxu0 %v124
    %277 = vmatpush.msra.mxu0 %v122
    %278 = vmatpush.msra.mxu0 %v120
    %279 = vmatmul.f32.gmra.mxu0 %v242
    %v280 = vpop.f32.mrf.mxu0
    %v281 = vadd.f32 %v154, %v280
    %282 = vdwg.mxu0
    %v283 = vld [vmem:[#allocation5] sm:$0xff]
    %v284 = vmul.f32 %v261, %v166
    %v285 = vmul.f32 %v281, %v167
    %v286 = vtanh.pop %v284
    %v287 = vtanh.pop %v285
    %v288 = vmul.f32 %v286, %v166
    %v289 = vmul.f32 %v287, %v167
    %v290 = vadd.f32 %v288, %v168
    %v291 = vadd.f32 %v289, %v169
    %v292 = vsel %vm170, %v291, %v283
    %v293 = vmul.f32 %v290, %v292
    %294 = vrot.lane.b32.xlu0 %v293, 64
    %v295 = vpop.permute.xlu0 %294
    %v296 = vadd.f32 %v293, %v295
    %v297 = vtanh.pop %v296
    %v298 = vmul.f32 %v291, %v297
    %299 = vrot.lane.b32.xlu0 %v298, 64
    %v300 = vpop.permute.xlu0 %299
    %v301 = vsel %vm170, %v300, %v298
    %302 = vst [vmem:[#allocation4] sm:$0xff] %v301
    %303 = vst [vmem:[#allocation5] sm:$0xff] %v296
    %s304 = scalar_lea.vmem [#allocation6], 16
    %v305 = vld [vmem:[%s304] sm:$0xff]
    %v306 = vld [vmem:[%s304 + $0x8] sm:$0xff]
    %v307 = vld [vmem:[#allocation2] sm:$0xff]
    %308 = vmatpush.msra.mxu0 %v117
    %309 = vmatpush.msra.mxu0 %v115
    %310 = vmatpush.msra.mxu0 %v113
    %311 = vmatpush.msra.mxu0 %v111
    %312 = vmatpush.msra.mxu0 %v109
    %313 = vmatpush.msra.mxu0 %v107
    %314 = vmatpush.msra.mxu0 %v105
    %315 = vmatpush.msra.mxu0 %v103
    %316 = vmatpush.msra.mxu0 %v101
    %317 = vmatpush.msra.mxu0 %v99
    %318 = vmatpush.msra.mxu0 %v97
    %319 = vmatpush.msra.mxu0 %v95
    %320 = vmatpush.msra.mxu0 %v93
    %321 = vmatpush.msra.mxu0 %v91
    %322 = vmatpush.msra.mxu0 %v89
    %323 = vmatpush.msra.mxu0 %v87
    %324 = vmatmul.f32.gmra.mxu0 %v307
    %v325 = vpop.f32.mrf.mxu0
    %v326 = vadd.f32 0.0, %v325
    %327 = vdwg.mxu0
    %328 = vmatpush.msra.mxu0 %v118
    %329 = vmatpush.msra.mxu0 %v116
    %330 = vmatpush.msra.mxu0 %v114
    %331 = vmatpush.msra.mxu0 %v112
    %332 = vmatpush.msra.mxu0 %v110
    %333 = vmatpush.msra.mxu0 %v108
    %334 = vmatpush.msra.mxu0 %v106
    %335 = vmatpush.msra.mxu0 %v104
    %336 = vmatpush.msra.mxu0 %v102
    %337 = vmatpush.msra.mxu0 %v100
    %338 = vmatpush.msra.mxu0 %v98
    %339 = vmatpush.msra.mxu0 %v96
    %340 = vmatpush.msra.mxu0 %v94
    %341 = vmatpush.msra.mxu0 %v92
    %342 = vmatpush.msra.mxu0 %v90
    %343 = vmatpush.msra.mxu0 %v88
    %344 = vmatmul.f32.gmra.mxu0 %v307
    %v345 = vpop.f32.mrf.mxu0
    %v346 = vadd.f32 0.0, %v345
    %347 = vdwg.mxu0
    %v348 = vadd.f32 %v305, %v326
    %v349 = vadd.f32 %v306, %v346
    %v350 = vld [vmem:[#allocation3] sm:$0xff]
    %v351 = vmul.f32 %v348, %v166
    %v352 = vmul.f32 %v349, %v167
    %v353 = vtanh.pop %v351
    %v354 = vtanh.pop %v352
    %v355 = vmul.f32 %v353, %v166
    %v356 = vmul.f32 %v354, %v167
    %v357 = vadd.f32 %v355, %v168
    %v358 = vadd.f32 %v356, %v169
    %v359 = vsel %vm170, %v358, %v350
    %v360 = vmul.f32 %v357, %v359
    %361 = vrot.lane.b32.xlu0 %v360, 64
    %v362 = vpop.permute.xlu0 %361
    %v363 = vadd.f32 %v360, %v362
    %v364 = vtanh.pop %v363
    %v365 = vmul.f32 %v358, %v364
    %366 = vrot.lane.b32.xlu0 %v365, 64
    %v367 = vpop.permute.xlu0 %366
    %v368 = vsel %vm170, %v367, %v365
    %369 = vst [vmem:[#allocation2] sm:$0xff] %v368
    %370 = vst [vmem:[#allocation3] sm:$0xff] %v363
    %v371 = vld [vmem:[#allocation4] sm:$0xff]
    %v372 = vsel %vm170, %v367, %v371
    %373 = vmatpush.msra.mxu0 %v149
    %374 = vmatpush.msra.mxu0 %v147
    %375 = vmatpush.msra.mxu0 %v145
    %376 = vmatpush.msra.mxu0 %v143
    %377 = vmatpush.msra.mxu0 %v141
    %378 = vmatpush.msra.mxu0 %v139
    %379 = vmatpush.msra.mxu0 %v137
    %380 = vmatpush.msra.mxu0 %v135
    %381 = vmatpush.msra.mxu0 %v133
    %382 = vmatpush.msra.mxu0 %v131
    %383 = vmatpush.msra.mxu0 %v129
    %384 = vmatpush.msra.mxu0 %v127
    %385 = vmatpush.msra.mxu0 %v125
    %386 = vmatpush.msra.mxu0 %v123
    %387 = vmatpush.msra.mxu0 %v121
    %388 = vmatpush.msra.mxu0 %v119
    %389 = vmatmul.f32.gmra.mxu0 %v372
    %v390 = vpop.f32.mrf.mxu0
    %v391 = vadd.f32 %v153, %v390
    %392 = vdwg.mxu0
    %393 = vmatpush.msra.mxu0 %v150
    %394 = vmatpush.msra.mxu0 %v148
    %395 = vmatpush.msra.mxu0 %v146
    %396 = vmatpush.msra.mxu0 %v144
    %397 = vmatpush.msra.mxu0 %v142
    %398 = vmatpush.msra.mxu0 %v140
    %399 = vmatpush.msra.mxu0 %v138
    %400 = vmatpush.msra.mxu0 %v136
    %401 = vmatpush.msra.mxu0 %v134
    %402 = vmatpush.msra.mxu0 %v132
    %403 = vmatpush.msra.mxu0 %v130
    %404 = vmatpush.msra.mxu0 %v128
    %405 = vmatpush.msra.mxu0 %v126
    %406 = vmatpush.msra.mxu0 %v124
    %407 = vmatpush.msra.mxu0 %v122
    %408 = vmatpush.msra.mxu0 %v120
    %409 = vmatmul.f32.gmra.mxu0 %v372
    %v410 = vpop.f32.mrf.mxu0
    %v411 = vadd.f32 %v154, %v410
    %412 = vdwg.mxu0
    %v413 = vld [vmem:[#allocation5] sm:$0xff]
    %v414 = vmul.f32 %v391, %v166
    %v415 = vmul.f32 %v411, %v167
    %v416 = vtanh.pop %v414
    %v417 = vtanh.pop %v415
    %v418 = vmul.f32 %v416, %v166
    %v419 = vmul.f32 %v417, %v167
    %v420 = vadd.f32 %v418, %v168
    %v421 = vadd.f32 %v419, %v169
    %v422 = vsel %vm170, %v421, %v413
    %v423 = vmul.f32 %v420, %v422
    %424 = vrot.lane.b32.xlu0 %v423, 64
    %v425 = vpop.permute.xlu0 %424
    %v426 = vadd.f32 %v423, %v425
    %v427 = vtanh.pop %v426
    %v428 = vmul.f32 %v421, %v427
    %429 = vrot.lane.b32.xlu0 %v428, 64
    %v430 = vpop.permute.xlu0 %429
    %v431 = vsel %vm170, %v430, %v428
    %432 = vst [vmem:[#allocation4] sm:$0xff] %v431
    %433 = vst [vmem:[#allocation5] sm:$0xff] %v426
    %s434 = scalar_lea.vmem [#allocation6], 32
    %v435 = vld [vmem:[%s434] sm:$0xff]
    %v436 = vld [vmem:[%s434 + $0x8] sm:$0xff]
    %v437 = vld [vmem:[#allocation2] sm:$0xff]
    %438 = vmatpush.msra.mxu0 %v117
    %439 = vmatpush.msra.mxu0 %v115
    %440 = vmatpush.msra.mxu0 %v113
    %441 = vmatpush.msra.mxu0 %v111
    %442 = vmatpush.msra.mxu0 %v109
    %443 = vmatpush.msra.mxu0 %v107
    %444 = vmatpush.msra.mxu0 %v105
    %445 = vmatpush.msra.mxu0 %v103
    %446 = vmatpush.msra.mxu0 %v101
    %447 = vmatpush.msra.mxu0 %v99
    %448 = vmatpush.msra.mxu0 %v97
    %449 = vmatpush.msra.mxu0 %v95
    %450 = vmatpush.msra.mxu0 %v93
    %451 = vmatpush.msra.mxu0 %v91
    %452 = vmatpush.msra.mxu0 %v89
    %453 = vmatpush.msra.mxu0 %v87
    %454 = vmatmul.f32.gmra.mxu0 %v437
    %v455 = vpop.f32.mrf.mxu0
    %v456 = vadd.f32 0.0, %v455
    %457 = vdwg.mxu0
    %458 = vmatpush.msra.mxu0 %v118
    %459 = vmatpush.msra.mxu0 %v116
    %460 = vmatpush.msra.mxu0 %v114
    %461 = vmatpush.msra.mxu0 %v112
    %462 = vmatpush.msra.mxu0 %v110
    %463 = vmatpush.msra.mxu0 %v108
    %464 = vmatpush.msra.mxu0 %v106
    %465 = vmatpush.msra.mxu0 %v104
    %466 = vmatpush.msra.mxu0 %v102
    %467 = vmatpush.msra.mxu0 %v100
    %468 = vmatpush.msra.mxu0 %v98
    %469 = vmatpush.msra.mxu0 %v96
    %470 = vmatpush.msra.mxu0 %v94
    %471 = vmatpush.msra.mxu0 %v92
    %472 = vmatpush.msra.mxu0 %v90
    %473 = vmatpush.msra.mxu0 %v88
    %474 = vmatmul.f32.gmra.mxu0 %v437
    %v475 = vpop.f32.mrf.mxu0
    %v476 = vadd.f32 0.0, %v475
    %477 = vdwg.mxu0
    %v478 = vadd.f32 %v435, %v456
    %v479 = vadd.f32 %v436, %v476
    %v480 = vld [vmem:[#allocation3] sm:$0xff]
    %v481 = vmul.f32 %v478, %v166
    %v482 = vmul.f32 %v479, %v167
    %v483 = vtanh.pop %v481
    %v484 = vtanh.pop %v482
    %v485 = vmul.f32 %v483, %v166
    %v486 = vmul.f32 %v484, %v167
    %v487 = vadd.f32 %v485, %v168
    %v488 = vadd.f32 %v486, %v169
    %v489 = vsel %vm170, %v488, %v480
    %v490 = vmul.f32 %v487, %v489
    %491 = vrot.lane.b32.xlu0 %v490, 64
    %v492 = vpop.permute.xlu0 %491
    %v493 = vadd.f32 %v490, %v492
    %v494 = vtanh.pop %v493
    %v495 = vmul.f32 %v488, %v494
    %496 = vrot.lane.b32.xlu0 %v495, 64
    %v497 = vpop.permute.xlu0 %496
    %v498 = vsel %vm170, %v497, %v495
    %499 = vst [vmem:[#allocation2] sm:$0xff] %v498
    %500 = vst [vmem:[#allocation3] sm:$0xff] %v493
    %v501 = vld [vmem:[#allocation4] sm:$0xff]
    %v502 = vsel %vm170, %v497, %v501
    %503 = vmatpush.msra.mxu0 %v149
    %504 = vmatpush.msra.mxu0 %v147
    %505 = vmatpush.msra.mxu0 %v145
    %506 = vmatpush.msra.mxu0 %v143
    %507 = vmatpush.msra.mxu0 %v141
    %508 = vmatpush.msra.mxu0 %v139
    %509 = vmatpush.msra.mxu0 %v137
    %510 = vmatpush.msra.mxu0 %v135
    %511 = vmatpush.msra.mxu0 %v133
    %512 = vmatpush.msra.mxu0 %v131
    %513 = vmatpush.msra.mxu0 %v129
    %514 = vmatpush.msra.mxu0 %v127
    %515 = vmatpush.msra.mxu0 %v125
    %516 = vmatpush.msra.mxu0 %v123
    %517 = vmatpush.msra.mxu0 %v121
    %518 = vmatpush.msra.mxu0 %v119
    %519 = vmatmul.f32.gmra.mxu0 %v502
    %v520 = vpop.f32.mrf.mxu0
    %v521 = vadd.f32 %v153, %v520
    %522 = vdwg.mxu0
    %523 = vmatpush.msra.mxu0 %v150
    %524 = vmatpush.msra.mxu0 %v148
    %525 = vmatpush.msra.mxu0 %v146
    %526 = vmatpush.msra.mxu0 %v144
    %527 = vmatpush.msra.mxu0 %v142
    %528 = vmatpush.msra.mxu0 %v140
    %529 = vmatpush.msra.mxu0 %v138
    %530 = vmatpush.msra.mxu0 %v136
    %531 = vmatpush.msra.mxu0 %v134
    %532 = vmatpush.msra.mxu0 %v132
    %533 = vmatpush.msra.mxu0 %v130
    %534 = vmatpush.msra.mxu0 %v128
    %535 = vmatpush.msra.mxu0 %v126
    %536 = vmatpush.msra.mxu0 %v124
    %537 = vmatpush.msra.mxu0 %v122
    %538 = vmatpush.msra.mxu0 %v120
    %539 = vmatmul.f32.gmra.mxu0 %v502
    %v540 = vpop.f32.mrf.mxu0
    %v541 = vadd.f32 %v154, %v540
    %542 = vdwg.mxu0
    %v543 = vld [vmem:[#allocation5] sm:$0xff]
    %v544 = vmul.f32 %v521, %v166
    %v545 = vmul.f32 %v541, %v167
    %v546 = vtanh.pop %v544
    %v547 = vtanh.pop %v545
    %v548 = vmul.f32 %v546, %v166
    %v549 = vmul.f32 %v547, %v167
    %v550 = vadd.f32 %v548, %v168
    %v551 = vadd.f32 %v549, %v169
    %v552 = vsel %vm170, %v551, %v543
    %v553 = vmul.f32 %v550, %v552
    %554 = vrot.lane.b32.xlu0 %v553, 64
    %v555 = vpop.permute.xlu0 %554
    %v556 = vadd.f32 %v553, %v555
    %v557 = vtanh.pop %v556
    %v558 = vmul.f32 %v551, %v557
    %559 = vrot.lane.b32.xlu0 %v558, 64
    %v560 = vpop.permute.xlu0 %559
    %v561 = vsel %vm170, %v560, %v558
    %562 = vst [vmem:[#allocation4] sm:$0xff] %v561
    %563 = vst [vmem:[#allocation5] sm:$0xff] %v556
    %s564 = scalar_lea.vmem [#allocation6], 48
    %v565 = vld [vmem:[%s564] sm:$0xff]
    %v566 = vld [vmem:[%s564 + $0x8] sm:$0xff]
    %v567 = vld [vmem:[#allocation2] sm:$0xff]
    %568 = vmatpush.msra.mxu0 %v117
    %569 = vmatpush.msra.mxu0 %v115
    %570 = vmatpush.msra.mxu0 %v113
    %571 = vmatpush.msra.mxu0 %v111
    %572 = vmatpush.msra.mxu0 %v109
    %573 = vmatpush.msra.mxu0 %v107
    %574 = vmatpush.msra.mxu0 %v105
    %575 = vmatpush.msra.mxu0 %v103
    %576 = vmatpush.msra.mxu0 %v101
    %577 = vmatpush.msra.mxu0 %v99
    %578 = vmatpush.msra.mxu0 %v97
    %579 = vmatpush.msra.mxu0 %v95
    %580 = vmatpush.msra.mxu0 %v93
    %581 = vmatpush.msra.mxu0 %v91
    %582 = vmatpush.msra.mxu0 %v89
    %583 = vmatpush.msra.mxu0 %v87
    %584 = vmatmul.f32.gmra.mxu0 %v567
    %v585 = vpop.f32.mrf.mxu0
    %v586 = vadd.f32 0.0, %v585
    %587 = vdwg.mxu0
    %588 = vmatpush.msra.mxu0 %v118
    %589 = vmatpush.msra.mxu0 %v116
    %590 = vmatpush.msra.mxu0 %v114
    %591 = vmatpush.msra.mxu0 %v112
    %592 = vmatpush.msra.mxu0 %v110
    %593 = vmatpush.msra.mxu0 %v108
    %594 = vmatpush.msra.mxu0 %v106
    %595 = vmatpush.msra.mxu0 %v104
    %596 = vmatpush.msra.mxu0 %v102
    %597 = vmatpush.msra.mxu0 %v100
    %598 = vmatpush.msra.mxu0 %v98
    %599 = vmatpush.msra.mxu0 %v96
    %600 = vmatpush.msra.mxu0 %v94
    %601 = vmatpush.msra.mxu0 %v92
    %602 = vmatpush.msra.mxu0 %v90
    %603 = vmatpush.msra.mxu0 %v88
    %604 = vmatmul.f32.gmra.mxu0 %v567
    %v605 = vpop.f32.mrf.mxu0
    %v606 = vadd.f32 0.0, %v605
    %607 = vdwg.mxu0
    %v608 = vadd.f32 %v565, %v586
    %v609 = vadd.f32 %v566, %v606
    %v610 = vld [vmem:[#allocation3] sm:$0xff]
    %v611 = vmul.f32 %v608, %v166
    %v612 = vmul.f32 %v609, %v167
    %v613 = vtanh.pop %v611
    %v614 = vtanh.pop %v612
    %v615 = vmul.f32 %v613, %v166
    %v616 = vmul.f32 %v614, %v167
    %v617 = vadd.f32 %v615, %v168
    %v618 = vadd.f32 %v616, %v169
    %v619 = vsel %vm170, %v618, %v610
    %v620 = vmul.f32 %v617, %v619
    %621 = vrot.lane.b32.xlu0 %v620, 64
    %v622 = vpop.permute.xlu0 %621
    %v623 = vadd.f32 %v620, %v622
    %v624 = vtanh.pop %v623
    %v625 = vmul.f32 %v618, %v624
    %626 = vrot.lane.b32.xlu0 %v625, 64
    %v627 = vpop.permute.xlu0 %626
    %v628 = vsel %vm170, %v627, %v625
    %629 = vst [vmem:[#allocation2] sm:$0xff] %v628
    %630 = vst [vmem:[#allocation3] sm:$0xff] %v623
    %v631 = vld [vmem:[#allocation4] sm:$0xff]
    %v632 = vsel %vm170, %v627, %v631
    %633 = vmatpush.msra.mxu0 %v149
    %634 = vmatpush.msra.mxu0 %v147
    %635 = vmatpush.msra.mxu0 %v145
    %636 = vmatpush.msra.mxu0 %v143
    %637 = vmatpush.msra.mxu0 %v141
    %638 = vmatpush.msra.mxu0 %v139
    %639 = vmatpush.msra.mxu0 %v137
    %640 = vmatpush.msra.mxu0 %v135
    %641 = vmatpush.msra.mxu0 %v133
    %642 = vmatpush.msra.mxu0 %v131
    %643 = vmatpush.msra.mxu0 %v129
    %644 = vmatpush.msra.mxu0 %v127
    %645 = vmatpush.msra.mxu0 %v125
    %646 = vmatpush.msra.mxu0 %v123
    %647 = vmatpush.msra.mxu0 %v121
    %648 = vmatpush.msra.mxu0 %v119
    %649 = vmatmul.f32.gmra.mxu0 %v632
    %v650 = vpop.f32.mrf.mxu0
    %v651 = vadd.f32 %v153, %v650
    %652 = vdwg.mxu0
    %653 = vmatpush.msra.mxu0 %v150
    %654 = vmatpush.msra.mxu0 %v148
    %655 = vmatpush.msra.mxu0 %v146
    %656 = vmatpush.msra.mxu0 %v144
    %657 = vmatpush.msra.mxu0 %v142
    %658 = vmatpush.msra.mxu0 %v140
    %659 = vmatpush.msra.mxu0 %v138
    %660 = vmatpush.msra.mxu0 %v136
    %661 = vmatpush.msra.mxu0 %v134
    %662 = vmatpush.msra.mxu0 %v132
    %663 = vmatpush.msra.mxu0 %v130
    %664 = vmatpush.msra.mxu0 %v128
    %665 = vmatpush.msra.mxu0 %v126
    %666 = vmatpush.msra.mxu0 %v124
    %667 = vmatpush.msra.mxu0 %v122
    %668 = vmatpush.msra.mxu0 %v120
    %669 = vmatmul.f32.gmra.mxu0 %v632
    %v670 = vpop.f32.mrf.mxu0
    %v671 = vadd.f32 %v154, %v670
    %672 = vdwg.mxu0
    %v673 = vld [vmem:[#allocation5] sm:$0xff]
    %v674 = vmul.f32 %v651, %v166
    %v675 = vmul.f32 %v671, %v167
    %v676 = vtanh.pop %v674
    %v677 = vtanh.pop %v675
    %v678 = vmul.f32 %v676, %v166
    %v679 = vmul.f32 %v677, %v167
    %v680 = vadd.f32 %v678, %v168
    %v681 = vadd.f32 %v679, %v169
    %v682 = vsel %vm170, %v681, %v673
    %v683 = vmul.f32 %v680, %v682
    %684 = vrot.lane.b32.xlu0 %v683, 64
    %v685 = vpop.permute.xlu0 %684
    %v686 = vadd.f32 %v683, %v685
    %v687 = vtanh.pop %v686
    %v688 = vmul.f32 %v681, %v687
    %689 = vrot.lane.b32.xlu0 %v688, 64
    %v690 = vpop.permute.xlu0 %689
    %v691 = vsel %vm170, %v690, %v688
    %692 = vst [vmem:[#allocation4] sm:$0xff] %v691
    %693 = vst [vmem:[#allocation5] sm:$0xff] %v686
    %s694 = scalar_lea.vmem [#allocation6], 64
    %v695 = vld [vmem:[%s694] sm:$0xff]
    %v696 = vld [vmem:[%s694 + $0x8] sm:$0xff]
    %v697 = vld [vmem:[#allocation2] sm:$0xff]
    %698 = vmatpush.msra.mxu0 %v117
    %699 = vmatpush.msra.mxu0 %v115
    %700 = vmatpush.msra.mxu0 %v113
    %701 = vmatpush.msra.mxu0 %v111
    %702 = vmatpush.msra.mxu0 %v109
    %703 = vmatpush.msra.mxu0 %v107
    %704 = vmatpush.msra.mxu0 %v105
    %705 = vmatpush.msra.mxu0 %v103
    %706 = vmatpush.msra.mxu0 %v101
    %707 = vmatpush.msra.mxu0 %v99
    %708 = vmatpush.msra.mxu0 %v97
    %709 = vmatpush.msra.mxu0 %v95
    %710 = vmatpush.msra.mxu0 %v93
    %711 = vmatpush.msra.mxu0 %v91
    %712 = vmatpush.msra.mxu0 %v89
    %713 = vmatpush.msra.mxu0 %v87
    %714 = vmatmul.f32.gmra.mxu0 %v697
    %v715 = vpop.f32.mrf.mxu0
    %v716 = vadd.f32 0.0, %v715
    %717 = vdwg.mxu0
    %718 = vmatpush.msra.mxu0 %v118
    %719 = vmatpush.msra.mxu0 %v116
    %720 = vmatpush.msra.mxu0 %v114
    %721 = vmatpush.msra.mxu0 %v112
    %722 = vmatpush.msra.mxu0 %v110
    %723 = vmatpush.msra.mxu0 %v108
    %724 = vmatpush.msra.mxu0 %v106
    %725 = vmatpush.msra.mxu0 %v104
    %726 = vmatpush.msra.mxu0 %v102
    %727 = vmatpush.msra.mxu0 %v100
    %728 = vmatpush.msra.mxu0 %v98
    %729 = vmatpush.msra.mxu0 %v96
    %730 = vmatpush.msra.mxu0 %v94
    %731 = vmatpush.msra.mxu0 %v92
    %732 = vmatpush.msra.mxu0 %v90
    %733 = vmatpush.msra.mxu0 %v88
    %734 = vmatmul.f32.gmra.mxu0 %v697
    %v735 = vpop.f32.mrf.mxu0
    %v736 = vadd.f32 0.0, %v735
    %737 = vdwg.mxu0
    %v738 = vadd.f32 %v695, %v716
    %v739 = vadd.f32 %v696, %v736
    %v740 = vld [vmem:[#allocation3] sm:$0xff]
    %v741 = vmul.f32 %v738, %v166
    %v742 = vmul.f32 %v739, %v167
    %v743 = vtanh.pop %v741
    %v744 = vtanh.pop %v742
    %v745 = vmul.f32 %v743, %v166
    %v746 = vmul.f32 %v744, %v167
    %v747 = vadd.f32 %v745, %v168
    %v748 = vadd.f32 %v746, %v169
    %v749 = vsel %vm170, %v748, %v740
    %v750 = vmul.f32 %v747, %v749
    %751 = vrot.lane.b32.xlu0 %v750, 64
    %v752 = vpop.permute.xlu0 %751
    %v753 = vadd.f32 %v750, %v752
    %v754 = vtanh.pop %v753
    %v755 = vmul.f32 %v748, %v754
    %756 = vrot.lane.b32.xlu0 %v755, 64
    %v757 = vpop.permute.xlu0 %756
    %v758 = vsel %vm170, %v757, %v755
    %759 = vst [vmem:[#allocation2] sm:$0xff] %v758
    %760 = vst [vmem:[#allocation3] sm:$0xff] %v753
    %v761 = vld [vmem:[#allocation4] sm:$0xff]
    %v762 = vsel %vm170, %v757, %v761
    %763 = vmatpush.msra.mxu0 %v149
    %764 = vmatpush.msra.mxu0 %v147
    %765 = vmatpush.msra.mxu0 %v145
    %766 = vmatpush.msra.mxu0 %v143
    %767 = vmatpush.msra.mxu0 %v141
    %768 = vmatpush.msra.mxu0 %v139
    %769 = vmatpush.msra.mxu0 %v137
    %770 = vmatpush.msra.mxu0 %v135
    %771 = vmatpush.msra.mxu0 %v133
    %772 = vmatpush.msra.mxu0 %v131
    %773 = vmatpush.msra.mxu0 %v129
    %774 = vmatpush.msra.mxu0 %v127
    %775 = vmatpush.msra.mxu0 %v125
    %776 = vmatpush.msra.mxu0 %v123
    %777 = vmatpush.msra.mxu0 %v121
    %778 = vmatpush.msra.mxu0 %v119
    %779 = vmatmul.f32.gmra.mxu0 %v762
    %v780 = vpop.f32.mrf.mxu0
    %v781 = vadd.f32 %v153, %v780
    %782 = vdwg.mxu0
    %783 = vmatpush.msra.mxu0 %v150
    %784 = vmatpush.msra.mxu0 %v148
    %785 = vmatpush.msra.mxu0 %v146
    %786 = vmatpush.msra.mxu0 %v144
    %787 = vmatpush.msra.mxu0 %v142
    %788 = vmatpush.msra.mxu0 %v140
    %789 = vmatpush.msra.mxu0 %v138
    %790 = vmatpush.msra.mxu0 %v136
    %791 = vmatpush.msra.mxu0 %v134
    %792 = vmatpush.msra.mxu0 %v132
    %793 = vmatpush.msra.mxu0 %v130
    %794 = vmatpush.msra.mxu0 %v128
    %795 = vmatpush.msra.mxu0 %v126
    %796 = vmatpush.msra.mxu0 %v124
    %797 = vmatpush.msra.mxu0 %v122
    %798 = vmatpush.msra.mxu0 %v120
    %799 = vmatmul.f32.gmra.mxu0 %v762
    %v800 = vpop.f32.mrf.mxu0
    %v801 = vadd.f32 %v154, %v800
    %802 = vdwg.mxu0
    %v803 = vld [vmem:[#allocation5] sm:$0xff]
    %v804 = vmul.f32 %v781, %v166
    %v805 = vmul.f32 %v801, %v167
    %v806 = vtanh.pop %v804
    %v807 = vtanh.pop %v805
    %v808 = vmul.f32 %v806, %v166
    %v809 = vmul.f32 %v807, %v167
    %v810 = vadd.f32 %v808, %v168
    %v811 = vadd.f32 %v809, %v169
    %v812 = vsel %vm170, %v811, %v803
    %v813 = vmul.f32 %v810, %v812
    %814 = vrot.lane.b32.xlu0 %v813, 64
    %v815 = vpop.permute.xlu0 %814
    %v816 = vadd.f32 %v813, %v815
    %v817 = vtanh.pop %v816
    %v818 = vmul.f32 %v811, %v817
    %819 = vrot.lane.b32.xlu0 %v818, 64
    %v820 = vpop.permute.xlu0 %819
    %v821 = vsel %vm170, %v820, %v818
    %822 = vst [vmem:[#allocation4] sm:$0xff] %v821
    %823 = vst [vmem:[#allocation5] sm:$0xff] %v816
    %s824 = scalar_lea.vmem [#allocation6], 80
    %v825 = vld [vmem:[%s824] sm:$0xff]
    %v826 = vld [vmem:[%s824 + $0x8] sm:$0xff]
    %v827 = vld [vmem:[#allocation2] sm:$0xff]
    %828 = vmatpush.msra.mxu0 %v117
    %829 = vmatpush.msra.mxu0 %v115
    %830 = vmatpush.msra.mxu0 %v113
    %831 = vmatpush.msra.mxu0 %v111
    %832 = vmatpush.msra.mxu0 %v109
    %833 = vmatpush.msra.mxu0 %v107
    %834 = vmatpush.msra.mxu0 %v105
    %835 = vmatpush.msra.mxu0 %v103
    %836 = vmatpush.msra.mxu0 %v101
    %837 = vmatpush.msra.mxu0 %v99
    %838 = vmatpush.msra.mxu0 %v97
    %839 = vmatpush.msra.mxu0 %v95
    %840 = vmatpush.msra.mxu0 %v93
    %841 = vmatpush.msra.mxu0 %v91
    %842 = vmatpush.msra.mxu0 %v89
    %843 = vmatpush.msra.mxu0 %v87
    %844 = vmatmul.f32.gmra.mxu0 %v827
    %v845 = vpop.f32.mrf.mxu0
    %v846 = vadd.f32 0.0, %v845
    %847 = vdwg.mxu0
    %848 = vmatpush.msra.mxu0 %v118
    %849 = vmatpush.msra.mxu0 %v116
    %850 = vmatpush.msra.mxu0 %v114
    %851 = vmatpush.msra.mxu0 %v112
    %852 = vmatpush.msra.mxu0 %v110
    %853 = vmatpush.msra.mxu0 %v108
    %854 = vmatpush.msra.mxu0 %v106
    %855 = vmatpush.msra.mxu0 %v104
    %856 = vmatpush.msra.mxu0 %v102
    %857 = vmatpush.msra.mxu0 %v100
    %858 = vmatpush.msra.mxu0 %v98
    %859 = vmatpush.msra.mxu0 %v96
    %860 = vmatpush.msra.mxu0 %v94
    %861 = vmatpush.msra.mxu0 %v92
    %862 = vmatpush.msra.mxu0 %v90
    %863 = vmatpush.msra.mxu0 %v88
    %864 = vmatmul.f32.gmra.mxu0 %v827
    %v865 = vpop.f32.mrf.mxu0
    %v866 = vadd.f32 0.0, %v865
    %867 = vdwg.mxu0
    %v868 = vadd.f32 %v825, %v846
    %v869 = vadd.f32 %v826, %v866
    %v870 = vld [vmem:[#allocation3] sm:$0xff]
    %v871 = vmul.f32 %v868, %v166
    %v872 = vmul.f32 %v869, %v167
    %v873 = vtanh.pop %v871
    %v874 = vtanh.pop %v872
    %v875 = vmul.f32 %v873, %v166
    %v876 = vmul.f32 %v874, %v167
    %v877 = vadd.f32 %v875, %v168
    %v878 = vadd.f32 %v876, %v169
    %v879 = vsel %vm170, %v878, %v870
    %v880 = vmul.f32 %v877, %v879
    %881 = vrot.lane.b32.xlu0 %v880, 64
    %v882 = vpop.permute.xlu0 %881
    %v883 = vadd.f32 %v880, %v882
    %v884 = vtanh.pop %v883
    %v885 = vmul.f32 %v878, %v884
    %886 = vrot.lane.b32.xlu0 %v885, 64
    %v887 = vpop.permute.xlu0 %886
    %v888 = vsel %vm170, %v887, %v885
    %889 = vst [vmem:[#allocation2] sm:$0xff] %v888
    %890 = vst [vmem:[#allocation3] sm:$0xff] %v883
    %v891 = vld [vmem:[#allocation4] sm:$0xff]
    %v892 = vsel %vm170, %v887, %v891
    %893 = vmatpush.msra.mxu0 %v149
    %894 = vmatpush.msra.mxu0 %v147
    %895 = vmatpush.msra.mxu0 %v145
    %896 = vmatpush.msra.mxu0 %v143
    %897 = vmatpush.msra.mxu0 %v141
    %898 = vmatpush.msra.mxu0 %v139
    %899 = vmatpush.msra.mxu0 %v137
    %900 = vmatpush.msra.mxu0 %v135
    %901 = vmatpush.msra.mxu0 %v133
    %902 = vmatpush.msra.mxu0 %v131
    %903 = vmatpush.msra.mxu0 %v129
    %904 = vmatpush.msra.mxu0 %v127
    %905 = vmatpush.msra.mxu0 %v125
    %906 = vmatpush.msra.mxu0 %v123
    %907 = vmatpush.msra.mxu0 %v121
    %908 = vmatpush.msra.mxu0 %v119
    %909 = vmatmul.f32.gmra.mxu0 %v892
    %v910 = vpop.f32.mrf.mxu0
    %v911 = vadd.f32 %v153, %v910
    %912 = vdwg.mxu0
    %913 = vmatpush.msra.mxu0 %v150
    %914 = vmatpush.msra.mxu0 %v148
    %915 = vmatpush.msra.mxu0 %v146
    %916 = vmatpush.msra.mxu0 %v144
    %917 = vmatpush.msra.mxu0 %v142
    %918 = vmatpush.msra.mxu0 %v140
    %919 = vmatpush.msra.mxu0 %v138
    %920 = vmatpush.msra.mxu0 %v136
    %921 = vmatpush.msra.mxu0 %v134
    %922 = vmatpush.msra.mxu0 %v132
    %923 = vmatpush.msra.mxu0 %v130
    %924 = vmatpush.msra.mxu0 %v128
    %925 = vmatpush.msra.mxu0 %v126
    %926 = vmatpush.msra.mxu0 %v124
    %927 = vmatpush.msra.mxu0 %v122
    %928 = vmatpush.msra.mxu0 %v120
    %929 = vmatmul.f32.gmra.mxu0 %v892
    %v930 = vpop.f32.mrf.mxu0
    %v931 = vadd.f32 %v154, %v930
    %932 = vdwg.mxu0
    %v933 = vld [vmem:[#allocation5] sm:$0xff]
    %v934 = vmul.f32 %v911, %v166
    %v935 = vmul.f32 %v931, %v167
    %v936 = vtanh.pop %v934
    %v937 = vtanh.pop %v935
    %v938 = vmul.f32 %v936, %v166
    %v939 = vmul.f32 %v937, %v167
    %v940 = vadd.f32 %v938, %v168
    %v941 = vadd.f32 %v939, %v169
    %v942 = vsel %vm170, %v941, %v933
    %v943 = vmul.f32 %v940, %v942
    %944 = vrot.lane.b32.xlu0 %v943, 64
    %v945 = vpop.permute.xlu0 %944
    %v946 = vadd.f32 %v943, %v945
    %v947 = vtanh.pop %v946
    %v948 = vmul.f32 %v941, %v947
    %949 = vrot.lane.b32.xlu0 %v948, 64
    %v950 = vpop.permute.xlu0 %949
    %v951 = vsel %vm170, %v950, %v948
    %952 = vst [vmem:[#allocation4] sm:$0xff] %v951
    %953 = vst [vmem:[#allocation5] sm:$0xff] %v946
    %s954 = scalar_lea.vmem [#allocation6], 96
    %v955 = vld [vmem:[%s954] sm:$0xff]
    %v956 = vld [vmem:[%s954 + $0x8] sm:$0xff]
    %v957 = vld [vmem:[#allocation2] sm:$0xff]
    %958 = vmatpush.msra.mxu0 %v117
    %959 = vmatpush.msra.mxu0 %v115
    %960 = vmatpush.msra.mxu0 %v113
    %961 = vmatpush.msra.mxu0 %v111
    %962 = vmatpush.msra.mxu0 %v109
    %963 = vmatpush.msra.mxu0 %v107
    %964 = vmatpush.msra.mxu0 %v105
    %965 = vmatpush.msra.mxu0 %v103
    %966 = vmatpush.msra.mxu0 %v101
    %967 = vmatpush.msra.mxu0 %v99
    %968 = vmatpush.msra.mxu0 %v97
    %969 = vmatpush.msra.mxu0 %v95
    %970 = vmatpush.msra.mxu0 %v93
    %971 = vmatpush.msra.mxu0 %v91
    %972 = vmatpush.msra.mxu0 %v89
    %973 = vmatpush.msra.mxu0 %v87
    %974 = vmatmul.f32.gmra.mxu0 %v957
    %v975 = vpop.f32.mrf.mxu0
    %v976 = vadd.f32 0.0, %v975
    %977 = vdwg.mxu0
    %978 = vmatpush.msra.mxu0 %v118
    %979 = vmatpush.msra.mxu0 %v116
    %980 = vmatpush.msra.mxu0 %v114
    %981 = vmatpush.msra.mxu0 %v112
    %982 = vmatpush.msra.mxu0 %v110
    %983 = vmatpush.msra.mxu0 %v108
    %984 = vmatpush.msra.mxu0 %v106
    %985 = vmatpush.msra.mxu0 %v104
    %986 = vmatpush.msra.mxu0 %v102
    %987 = vmatpush.msra.mxu0 %v100
    %988 = vmatpush.msra.mxu0 %v98
    %989 = vmatpush.msra.mxu0 %v96
    %990 = vmatpush.msra.mxu0 %v94
    %991 = vmatpush.msra.mxu0 %v92
    %992 = vmatpush.msra.mxu0 %v90
    %993 = vmatpush.msra.mxu0 %v88
    %994 = vmatmul.f32.gmra.mxu0 %v957
    %v995 = vpop.f32.mrf.mxu0
    %v996 = vadd.f32 0.0, %v995
    %997 = vdwg.mxu0
    %v998 = vadd.f32 %v955, %v976
    %v999 = vadd.f32 %v956, %v996
    %v1000 = vld [vmem:[#allocation3] sm:$0xff]
    %v1001 = vmul.f32 %v998, %v166
    %v1002 = vmul.f32 %v999, %v167
    %v1003 = vtanh.pop %v1001
    %v1004 = vtanh.pop %v1002
    %v1005 = vmul.f32 %v1003, %v166
    %v1006 = vmul.f32 %v1004, %v167
    %v1007 = vadd.f32 %v1005, %v168
    %v1008 = vadd.f32 %v1006, %v169
    %v1009 = vsel %vm170, %v1008, %v1000
    %v1010 = vmul.f32 %v1007, %v1009
    %1011 = vrot.lane.b32.xlu0 %v1010, 64
    %v1012 = vpop.permute.xlu0 %1011
    %v1013 = vadd.f32 %v1010, %v1012
    %v1014 = vtanh.pop %v1013
    %v1015 = vmul.f32 %v1008, %v1014
    %1016 = vrot.lane.b32.xlu0 %v1015, 64
    %v1017 = vpop.permute.xlu0 %1016
    %v1018 = vsel %vm170, %v1017, %v1015
    %1019 = vst [vmem:[#allocation2] sm:$0xff] %v1018
    %1020 = vst [vmem:[#allocation3] sm:$0xff] %v1013
    %v1021 = vld [vmem:[#allocation4] sm:$0xff]
    %v1022 = vsel %vm170, %v1017, %v1021
    %1023 = vmatpush.msra.mxu0 %v149
    %1024 = vmatpush.msra.mxu0 %v147
    %1025 = vmatpush.msra.mxu0 %v145
    %1026 = vmatpush.msra.mxu0 %v143
    %1027 = vmatpush.msra.mxu0 %v141
    %1028 = vmatpush.msra.mxu0 %v139
    %1029 = vmatpush.msra.mxu0 %v137
    %1030 = vmatpush.msra.mxu0 %v135
    %1031 = vmatpush.msra.mxu0 %v133
    %1032 = vmatpush.msra.mxu0 %v131
    %1033 = vmatpush.msra.mxu0 %v129
    %1034 = vmatpush.msra.mxu0 %v127
    %1035 = vmatpush.msra.mxu0 %v125
    %1036 = vmatpush.msra.mxu0 %v123
    %1037 = vmatpush.msra.mxu0 %v121
    %1038 = vmatpush.msra.mxu0 %v119
    %1039 = vmatmul.f32.gmra.mxu0 %v1022
    %v1040 = vpop.f32.mrf.mxu0
    %v1041 = vadd.f32 %v153, %v1040
    %1042 = vdwg.mxu0
    %1043 = vmatpush.msra.mxu0 %v150
    %1044 = vmatpush.msra.mxu0 %v148
    %1045 = vmatpush.msra.mxu0 %v146
    %1046 = vmatpush.msra.mxu0 %v144
    %1047 = vmatpush.msra.mxu0 %v142
    %1048 = vmatpush.msra.mxu0 %v140
    %1049 = vmatpush.msra.mxu0 %v138
    %1050 = vmatpush.msra.mxu0 %v136
    %1051 = vmatpush.msra.mxu0 %v134
    %1052 = vmatpush.msra.mxu0 %v132
    %1053 = vmatpush.msra.mxu0 %v130
    %1054 = vmatpush.msra.mxu0 %v128
    %1055 = vmatpush.msra.mxu0 %v126
    %1056 = vmatpush.msra.mxu0 %v124
    %1057 = vmatpush.msra.mxu0 %v122
    %1058 = vmatpush.msra.mxu0 %v120
    %1059 = vmatmul.f32.gmra.mxu0 %v1022
    %v1060 = vpop.f32.mrf.mxu0
    %v1061 = vadd.f32 %v154, %v1060
    %1062 = vdwg.mxu0
    %v1063 = vld [vmem:[#allocation5] sm:$0xff]
    %v1064 = vmul.f32 %v1041, %v166
    %v1065 = vmul.f32 %v1061, %v167
    %v1066 = vtanh.pop %v1064
    %v1067 = vtanh.pop %v1065
    %v1068 = vmul.f32 %v1066, %v166
    %v1069 = vmul.f32 %v1067, %v167
    %v1070 = vadd.f32 %v1068, %v168
    %v1071 = vadd.f32 %v1069, %v169
    %v1072 = vsel %vm170, %v1071, %v1063
    %v1073 = vmul.f32 %v1070, %v1072
    %1074 = vrot.lane.b32.xlu0 %v1073, 64
    %v1075 = vpop.permute.xlu0 %1074
    %v1076 = vadd.f32 %v1073, %v1075
    %v1077 = vtanh.pop %v1076
    %v1078 = vmul.f32 %v1071, %v1077
    %1079 = vrot.lane.b32.xlu0 %v1078, 64
    %v1080 = vpop.permute.xlu0 %1079
    %v1081 = vsel %vm170, %v1080, %v1078
    %1082 = vst [vmem:[#allocation4] sm:$0xff] %v1081
    %1083 = vst [vmem:[#allocation5] sm:$0xff] %v1076
    %s1084 = scalar_lea.vmem [#allocation6], 112
    %v1085 = vld [vmem:[%s1084] sm:$0xff]
    %v1086 = vld [vmem:[%s1084 + $0x8] sm:$0xff]
    %v1087 = vld [vmem:[#allocation2] sm:$0xff]
    %1088 = vmatpush.msra.mxu0 %v117
    %1089 = vmatpush.msra.mxu0 %v115
    %1090 = vmatpush.msra.mxu0 %v113
    %1091 = vmatpush.msra.mxu0 %v111
    %1092 = vmatpush.msra.mxu0 %v109
    %1093 = vmatpush.msra.mxu0 %v107
    %1094 = vmatpush.msra.mxu0 %v105
    %1095 = vmatpush.msra.mxu0 %v103
    %1096 = vmatpush.msra.mxu0 %v101
    %1097 = vmatpush.msra.mxu0 %v99
    %1098 = vmatpush.msra.mxu0 %v97
    %1099 = vmatpush.msra.mxu0 %v95
    %1100 = vmatpush.msra.mxu0 %v93
    %1101 = vmatpush.msra.mxu0 %v91
    %1102 = vmatpush.msra.mxu0 %v89
    %1103 = vmatpush.msra.mxu0 %v87
    %1104 = vmatmul.f32.gmra.mxu0 %v1087
    %v1105 = vpop.f32.mrf.mxu0
    %v1106 = vadd.f32 0.0, %v1105
    %1107 = vdwg.mxu0
    %1108 = vmatpush.msra.mxu0 %v118
    %1109 = vmatpush.msra.mxu0 %v116
    %1110 = vmatpush.msra.mxu0 %v114
    %1111 = vmatpush.msra.mxu0 %v112
    %1112 = vmatpush.msra.mxu0 %v110
    %1113 = vmatpush.msra.mxu0 %v108
    %1114 = vmatpush.msra.mxu0 %v106
    %1115 = vmatpush.msra.mxu0 %v104
    %1116 = vmatpush.msra.mxu0 %v102
    %1117 = vmatpush.msra.mxu0 %v100
    %1118 = vmatpush.msra.mxu0 %v98
    %1119 = vmatpush.msra.mxu0 %v96
    %1120 = vmatpush.msra.mxu0 %v94
    %1121 = vmatpush.msra.mxu0 %v92
    %1122 = vmatpush.msra.mxu0 %v90
    %1123 = vmatpush.msra.mxu0 %v88
    %1124 = vmatmul.f32.gmra.mxu0 %v1087
    %v1125 = vpop.f32.mrf.mxu0
    %v1126 = vadd.f32 0.0, %v1125
    %1127 = vdwg.mxu0
    %v1128 = vadd.f32 %v1085, %v1106
    %v1129 = vadd.f32 %v1086, %v1126
    %v1130 = vld [vmem:[#allocation3] sm:$0xff]
    %v1131 = vmul.f32 %v1128, %v166
    %v1132 = vmul.f32 %v1129, %v167
    %v1133 = vtanh.pop %v1131
    %v1134 = vtanh.pop %v1132
    %v1135 = vmul.f32 %v1133, %v166
    %v1136 = vmul.f32 %v1134, %v167
    %v1137 = vadd.f32 %v1135, %v168
    %v1138 = vadd.f32 %v1136, %v169
    %v1139 = vsel %vm170, %v1138, %v1130
    %v1140 = vmul.f32 %v1137, %v1139
    %1141 = vrot.lane.b32.xlu0 %v1140, 64
    %v1142 = vpop.permute.xlu0 %1141
    %v1143 = vadd.f32 %v1140, %v1142
    %v1144 = vtanh.pop %v1143
    %v1145 = vmul.f32 %v1138, %v1144
    %1146 = vrot.lane.b32.xlu0 %v1145, 64
    %v1147 = vpop.permute.xlu0 %1146
    %v1148 = vsel %vm170, %v1147, %v1145
    %1149 = vst [vmem:[#allocation2] sm:$0xff] %v1148
    %1150 = vst [vmem:[#allocation3] sm:$0xff] %v1143
    %v1151 = vld [vmem:[#allocation4] sm:$0xff]
    %v1152 = vsel %vm170, %v1147, %v1151
    %1153 = vmatpush.msra.mxu0 %v149
    %1154 = vmatpush.msra.mxu0 %v147
    %1155 = vmatpush.msra.mxu0 %v145
    %1156 = vmatpush.msra.mxu0 %v143
    %1157 = vmatpush.msra.mxu0 %v141
    %1158 = vmatpush.msra.mxu0 %v139
    %1159 = vmatpush.msra.mxu0 %v137
    %1160 = vmatpush.msra.mxu0 %v135
    %1161 = vmatpush.msra.mxu0 %v133
    %1162 = vmatpush.msra.mxu0 %v131
    %1163 = vmatpush.msra.mxu0 %v129
    %1164 = vmatpush.msra.mxu0 %v127
    %1165 = vmatpush.msra.mxu0 %v125
    %1166 = vmatpush.msra.mxu0 %v123
    %1167 = vmatpush.msra.mxu0 %v121
    %1168 = vmatpush.msra.mxu0 %v119
    %1169 = vmatmul.f32.gmra.mxu0 %v1152
    %v1170 = vpop.f32.mrf.mxu0
    %v1171 = vadd.f32 %v153, %v1170
    %1172 = vdwg.mxu0
    %1173 = vmatpush.msra.mxu0 %v150
    %1174 = vmatpush.msra.mxu0 %v148
    %1175 = vmatpush.msra.mxu0 %v146
    %1176 = vmatpush.msra.mxu0 %v144
    %1177 = vmatpush.msra.mxu0 %v142
    %1178 = vmatpush.msra.mxu0 %v140
    %1179 = vmatpush.msra.mxu0 %v138
    %1180 = vmatpush.msra.mxu0 %v136
    %1181 = vmatpush.msra.mxu0 %v134
    %1182 = vmatpush.msra.mxu0 %v132
    %1183 = vmatpush.msra.mxu0 %v130
    %1184 = vmatpush.msra.mxu0 %v128
    %1185 = vmatpush.msra.mxu0 %v126
    %1186 = vmatpush.msra.mxu0 %v124
    %1187 = vmatpush.msra.mxu0 %v122
    %1188 = vmatpush.msra.mxu0 %v120
    %1189 = vmatmul.f32.gmra.mxu0 %v1152
    %v1190 = vpop.f32.mrf.mxu0
    %v1191 = vadd.f32 %v154, %v1190
    %1192 = vdwg.mxu0
    %v1193 = vld [vmem:[#allocation5] sm:$0xff]
    %v1194 = vmul.f32 %v1171, %v166
    %v1195 = vmul.f32 %v1191, %v167
    %v1196 = vtanh.pop %v1194
    %v1197 = vtanh.pop %v1195
    %v1198 = vmul.f32 %v1196, %v166
    %v1199 = vmul.f32 %v1197, %v167
    %v1200 = vadd.f32 %v1198, %v168
    %v1201 = vadd.f32 %v1199, %v169
    %v1202 = vsel %vm170, %v1201, %v1193
    %v1203 = vmul.f32 %v1200, %v1202
    %1204 = vrot.lane.b32.xlu0 %v1203, 64
    %v1205 = vpop.permute.xlu0 %1204
    %v1206 = vadd.f32 %v1203, %v1205
    %v1207 = vtanh.pop %v1206
    %v1208 = vmul.f32 %v1201, %v1207
    %1209 = vrot.lane.b32.xlu0 %v1208, 64
    %v1210 = vpop.permute.xlu0 %1209
    %v1211 = vsel %vm170, %v1210, %v1208
    %1212 = vst [vmem:[#allocation4] sm:$0xff] %v1211
    %1213 = vst [vmem:[#allocation5] sm:$0xff] %v1206
    %v1214 = vld [vmem:[#allocation4] sm:$0xff]
    %v1215 = vld [vmem:[#allocation12] sm:$0xff]
    %v1216 = vld [vmem:[#allocation12 + $0x8] sm:$0xff]
    %v1217 = vld [vmem:[#allocation12 + $0x10] sm:$0xff]
    %v1218 = vld [vmem:[#allocation12 + $0x18] sm:$0xff]
    %v1219 = vld [vmem:[#allocation12 + $0x20] sm:$0xff]
    %v1220 = vld [vmem:[#allocation12 + $0x28] sm:$0xff]
    %v1221 = vld [vmem:[#allocation12 + $0x30] sm:$0xff]
    %v1222 = vld [vmem:[#allocation12 + $0x38] sm:$0xff]
    %v1223 = vld [vmem:[#allocation12 + $0x40] sm:$0xff]
    %v1224 = vld [vmem:[#allocation12 + $0x48] sm:$0xff]
    %v1225 = vld [vmem:[#allocation12 + $0x50] sm:$0xff]
    %v1226 = vld [vmem:[#allocation12 + $0x58] sm:$0xff]
    %v1227 = vld [vmem:[#allocation12 + $0x60] sm:$0xff]
    %v1228 = vld [vmem:[#allocation12 + $0x68] sm:$0xff]
    %v1229 = vld [vmem:[#allocation12 + $0x70] sm:$0xff]
    %v1230 = vld [vmem:[#allocation12 + $0x78] sm:$0xff]
    %v1231 = vld [vmem:[%s5] sm:$0x1]
    %v1233 = vperm.slane %v1231, 0
    %1235 = vmatpush.msra.mxu0 %v1230
    %1236 = vmatpush.msra.mxu0 %v1229
    %1237 = vmatpush.msra.mxu0 %v1228
    %1238 = vmatpush.msra.mxu0 %v1227
    %1239 = vmatpush.msra.mxu0 %v1226
    %1240 = vmatpush.msra.mxu0 %v1225
    %1241 = vmatpush.msra.mxu0 %v1224
    %1242 = vmatpush.msra.mxu0 %v1223
    %1243 = vmatpush.msra.mxu0 %v1222
    %1244 = vmatpush.msra.mxu0 %v1221
    %1245 = vmatpush.msra.mxu0 %v1220
    %1246 = vmatpush.msra.mxu0 %v1219
    %1247 = vmatpush.msra.mxu0 %v1218
    %1248 = vmatpush.msra.mxu0 %v1217
    %1249 = vmatpush.msra.mxu0 %v1216
    %1250 = vmatpush.msra.mxu0 %v1215
    %1251 = vmatmul.f32.gmra.mxu0 %v1214
    %v1252 = vpop.f32.mrf.mxu0
    %v1253 = vadd.f32 %v1233, %v1252
    %1254 = vdwg.mxu0
    %1255 = vst [vmem:[#allocation14] sm:$0xff] %v1253
    // Predicated region
    $region42: #{tpu_custom_call.1} parent=1 // pred_check
      _
    $region43: #{tpu_custom_call.1} parent=1 // pred_check_branch
      %1257 = sbr.rel (0) target = $region45
    $region44: #{tpu_custom_call.1} parent=1 // pred_region
      %1259 = vsyncadd [#allocation8], 0
      %s1261 = sshll.u32 [#allocation14], 4
      %s1262 = int_to_ptr.vmem [resolvable:$true] %s1261
      %s1263 = sshll.u32 %s6, 4
      %s1264 = int_to_ptr.hbm [resolvable:$true] %s1263
      %1266 = dma.vmem_to_hbm [thread:$0]  %s1262, 128, %s1264, [#allocation8]
    $region45: #{tpu_custom_call.1} parent=1 // pred_fallthru
      _
    // Predicated region
    $region46: #{tpu_custom_call.1} parent=1 // pred_check
      _
    $region47: #{tpu_custom_call.1} parent=1 // pred_check_branch
      %1268 = sbr.rel (0) target = $region49
    $region48: #{tpu_custom_call.1} parent=1 // pred_region
      %1270 = dma.done [#allocation8], 128
    $region49: #{tpu_custom_call.1} parent=1 // pred_fallthru
      _
    %1271 = vsyncpa [#allocation7], 1
    %1272 = vsyncpa [#allocation10], 1
    %1273 = vsyncpa [#allocation13], 1
    %1274 = vsyncpa [#allocation8], 1

</llo_original>
